<compile_context>
chip_gen: v6e
topology: v6e:2x2x1
jax: 0.10.0
libtpu: 0.0.40
codegen_flags: <defaults>
</compile_context>

<pallas_src>
import functools
import math

import jax
import jax.numpy as jnp
from jax import lax
from jax.experimental import pallas as pl
from jax.experimental.pallas import tpu as pltpu


def _round_up(x, m):
    return (x + m - 1) // m * m


def _attention_kernel(enc_ref, hproj_ref, wet_ref, vcol_ref, out_ref, *, block_b, seq_t):
    """One batch block.

    enc_ref   : (block_b*T, H)  mxu dtype  encoder rows, b-major: row i = b*T + t
    hproj_ref : (block_b, H)    f32        W_h @ hidden[b] + bias (hoisted to wrapper)
    wet_ref   : (H, H)          mxu dtype  W_e^T (encoder half of attn weight)
    vcol_ref  : (H, 1)          f32        v as a column vector
    out_ref   : (block_b, T)    f32        softmax_t attention weights
    """
    f32 = jnp.float32
    i32 = jnp.int32
    bt = block_b * seq_t

    # ---- 0/1 selector matrices from 2-D iotas (no div/mod, no transpose/reshape) ----
    # rsel[i, b] = 1 iff row i belongs to local batch b  (b*T <= i < (b+1)*T)
    ri = lax.broadcasted_iota(i32, (bt, block_b), 0)
    bi = lax.broadcasted_iota(i32, (bt, block_b), 1)
    lo = bi * seq_t
    rsel = jnp.logical_and(ri >= lo, ri < lo + seq_t).astype(f32)        # (BT, Bb)

    # psum[b, i] = rsel[i, b], generated directly (avoids an in-kernel transpose)
    bb = lax.broadcasted_iota(i32, (block_b, bt), 0)
    ii = lax.broadcasted_iota(i32, (block_b, bt), 1)
    lo2 = bb * seq_t
    psum = jnp.logical_and(ii >= lo2, ii < lo2 + seq_t).astype(f32)      # (Bb, BT)

    # tmask[i, t] = 1 iff (i mod T) == t, built without integer div/mod:
    #   b(i) = sum_b b * rsel[i, b];  t(i) = i - T * b(i)
    b_of_i = jnp.sum(rsel * bi.astype(f32), axis=1, keepdims=True)       # (BT, 1)
    i_col = lax.broadcasted_iota(i32, (bt, 1), 0).astype(f32)
    t_of_i = i_col - seq_t * b_of_i                                      # (BT, 1)
    tt = lax.broadcasted_iota(i32, (bt, seq_t), 1).astype(f32)
    tmask = (tt == t_of_i).astype(f32)                                   # (BT, T)

    # ---- energy = tanh(W_e @ enc + (W_h @ h + bias)) over all (b, t) rows at once ----
    # Broadcast the per-batch hidden projection to per-(b,t) rows with a tiny 0/1
    # matmul (MXU is idle anyway) instead of an in-kernel repeat/reshape.
    hrep = jnp.dot(rsel, hproj_ref[...], preferred_element_type=f32)     # (BT, H)
    pre = jnp.dot(enc_ref[...], wet_ref[...], preferred_element_type=f32) + hrep
    energy = jnp.tanh(pre)                                               # (BT, H) f32

    # ---- scores: v . energy per row, then scatter the (BT,) column into (Bb, T) ----
    col_scores = jnp.dot(energy, vcol_ref[...], preferred_element_type=f32)   # (BT, 1)
    scores = jnp.dot(psum, col_scores * tmask, preferred_element_type=f32)    # (Bb, T)

    # ---- numerically-stable softmax over T (lane axis) ----
    m = jnp.max(scores, axis=-1, keepdims=True)
    e = jnp.exp(scores - m)
    denom = jnp.sum(e, axis=-1, keepdims=True)
    r = pl.reciprocal(denom, approx=True)      # EUP slot; one Newton step restores f32 accuracy
    r = r * (2.0 - denom * r)
    out_ref[...] = e * r


def attention_forward(hidden, encoder_outputs, attn_weight, attn_bias, v,
                      *, mxu_dtype=jnp.bfloat16, block_rows=256):
    """Pallas-backed forward pass.

    hidden:          (1, B, H) float32
    encoder_outputs: (B, T, H) float32
    attn_weight:     (H, 2H)   float32   (nn.Linear(2H, H).weight)
    attn_bias:       (H,)      float32
    v:               (H,)      float32
    returns:         (B, 1, T) float32

    block_rows: target M-dimension (block_b*T) per grid step; 256 suits v6e/v7x,
                128 is enough to saturate v5e's 128-wide MXU.
    """
    B, T, H = encoder_outputs.shape

    # Hoisted hidden projection: one small f32 XLA matmul, done once per forward.
    w_h = attn_weight[:, :H]                       # hidden half of the Linear weight
    w_e_t = attn_weight[:, H:].T                   # encoder half, pre-transposed
    h_proj = (hidden[0] @ w_h.T + attn_bias).astype(jnp.float32)   # (B, H)

    # Batch blocking: block_b a multiple of 8 (sublane tiling), block_b*T >= block_rows.
    block_b = min(_round_up(B, 8), _round_up(pl.cdiv(block_rows, T), 8))
    b_pad = _round_up(B, block_b)
    if b_pad != B:
        encoder_outputs = jnp.pad(encoder_outputs, ((0, b_pad - B), (0, 0), (0, 0)))
        h_proj = jnp.pad(h_proj, ((0, b_pad - B), (0, 0)))

    # Free layout plumbing in the wrapper: (B,T,H) -> (B*T, H), cast MXU inputs.
    enc_flat = encoder_outputs.reshape(b_pad * T, H).astype(mxu_dtype)
    wet = w_e_t.astype(mxu_dtype)
    vcol = v.reshape(H, 1).astype(jnp.float32)

    n_blocks = b_pad // block_b
    bt = block_b * T

    cost = pl.CostEstimate(
        flops=int(2 * b_pad * T * H * (H + block_b + 1) + 2 * b_pad * block_b * T * T),
        transcendentals=int(b_pad * T * (H + 1)),
        bytes_accessed=int(enc_flat.size * enc_flat.dtype.itemsize
                           + h_proj.size * 4
                           + wet.size * wet.dtype.itemsize
                           + vcol.size * 4
                           + b_pad * T * 4),
    )

    kernel = functools.partial(_attention_kernel, block_b=block_b, seq_t=T)

    out2d = pl.pallas_call(
        kernel,
        out_shape=jax.ShapeDtypeStruct((b_pad, T), jnp.float32),
        grid_spec=pl.GridSpec(
            grid=(n_blocks,),
            in_specs=[
                pl.BlockSpec((bt, H), lambda i: (i, 0)),        # encoder rows (b-major)
                pl.BlockSpec((block_b, H), lambda i: (i, 0)),   # hidden projection
                pl.BlockSpec((H, H), lambda i: (0, 0)),         # W_e^T (constant)
                pl.BlockSpec((H, 1), lambda i: (0, 0)),         # v column (constant)
            ],
            out_specs=pl.BlockSpec((block_b, T), lambda i: (i, 0)),
        ),
        compiler_params=pltpu.CompilerParams(
            dimension_semantics=("parallel",),      # batch-block axis shards across TCs
            vmem_limit_bytes=32 * 1024 * 1024,
        ),
        cost_estimate=cost,
    )(enc_flat, h_proj, wet, vcol)

    return out2d[:B][:, None, :]                    # (B, 1, T)


def _reference_forward(hidden, encoder_outputs, attn_weight, attn_bias, v):
    """Pure-JAX reference mirroring the PyTorch module exactly (f32)."""
    B, T, H = encoder_outputs.shape
    hns = jnp.broadcast_to(hidden[0][:, None, :], (B, T, H))          # repeat + transpose
    cat = jnp.concatenate([hns, encoder_outputs], axis=2)             # (B, T, 2H)
    energy = jnp.tanh(cat @ attn_weight.T + attn_bias)                # (B, T, H)
    energy = jnp.swapaxes(energy, 2, 1)                               # (B, H, T)
    vb = jnp.broadcast_to(v[None, None, :], (B, 1, H))                # (B, 1, H)
    attn_energies = jnp.squeeze(vb @ energy, axis=1)                  # (B, T)
    return jax.nn.softmax(attn_energies, axis=1)[:, None, :]          # (B, 1, T)


if __name__ == "__main__":
    B, T, H = 64, 8, 32  # batch, lag (seq), hidden_size

    key = jax.random.PRNGKey(0)
    k_h, k_e, k_w, k_b, k_v = jax.random.split(key, 5)

    # Deterministic parameter init mirroring the PyTorch module's __init__:
    #   nn.Linear(2H, H): weight/bias ~ U(-1/sqrt(2H), 1/sqrt(2H));  v ~ N(0, (1/sqrt(H))^2)
    bound = 1.0 / math.sqrt(2 * H)
    attn_weight = jax.random.uniform(k_w, (H, 2 * H), jnp.float32, -bound, bound)
    attn_bias = jax.random.uniform(k_b, (H,), jnp.float32, -bound, bound)
    v = jax.random.normal(k_v, (H,), jnp.float32) * (1.0 / math.sqrt(H))

    hidden = jax.random.normal(k_h, (1, B, H), jnp.float32)
    encoder_outputs = jax.random.normal(k_e, (B, T, H), jnp.float32)

    ref = _reference_forward(hidden, encoder_outputs, attn_weight, attn_bias, v)

    # f32 MXU path: tight check of the kernel structure.
    out_f32 = attention_forward(hidden, encoder_outputs, attn_weight, attn_bias, v,
                                mxu_dtype=jnp.float32)
    out_f32 = jax.block_until_ready(out_f32)
    assert out_f32.shape == (B, 1, T)
    assert jnp.allclose(out_f32, ref, atol=1e-3, rtol=1e-3), "f32 path mismatch vs reference"

    # Default bf16 MXU path (f32 accumulation / tanh / softmax): looser tolerance.
    out = attention_forward(hidden, encoder_outputs, attn_weight, attn_bias, v)
    out = jax.block_until_ready(out)
    assert out.shape == (B, 1, T)
    assert jnp.allclose(out, ref, atol=5e-3, rtol=5e-3), "bf16 path mismatch vs reference"
    # attention weights sum to 1 over the lag axis
    assert jnp.allclose(jnp.sum(out, axis=-1), 1.0, atol=2e-3)

    print("KERNEL_OK")
</pallas_src>

<mosaic_0001>
module attributes {stable_mosaic.version = 11 : i64} {
  func.func @_attention_kernel(%arg0: i32, %arg1: memref<256x32xf32, #tpu.memory_space<vmem>>, %arg2: memref<32x32xf32, #tpu.memory_space<vmem>>, %arg3: memref<32x32xf32, #tpu.memory_space<vmem>>, %arg4: memref<32x1xf32, #tpu.memory_space<vmem>>, %arg5: memref<32x8xf32, #tpu.memory_space<vmem>>) attributes {dimension_semantics = [#tpu.dimension_semantics<parallel>], iteration_bounds = array<i64: 2>, scalar_prefetch = 0 : i64, scratch_operands = 0 : i64, tpu.core_type = #tpu.core_type<tc>, window_params = [{transform_indices = @transform_0, window_bounds = array<i64: 256, 32>}, {transform_indices = @transform_1, window_bounds = array<i64: 32, 32>}, {pipeline_mode = #tpu.pipeline_mode<synchronous>, transform_indices = @transform_2, window_bounds = array<i64: 32, 32>}, {pipeline_mode = #tpu.pipeline_mode<synchronous>, transform_indices = @transform_3, window_bounds = array<i64: 32, 1>}, {transform_indices = @transform_4, window_bounds = array<i64: 32, 8>}]} {
    %0 = tpu.iota {dimensions = array<i32: 0>} : vector<256x32xi32>
    %1 = tpu.iota {dimensions = array<i32: 1>} : vector<256x32xi32>
    %c8_i32 = arith.constant 8 : i32
    %2 = vector.broadcast %c8_i32 : i32 to vector<256x32xi32>
    %3 = arith.muli %1, %2 : vector<256x32xi32>
    %4 = arith.cmpi sge, %0, %3 : vector<256x32xi32>
    %c8_i32_0 = arith.constant 8 : i32
    %5 = vector.broadcast %c8_i32_0 : i32 to vector<256x32xi32>
    %6 = arith.addi %3, %5 : vector<256x32xi32>
    %7 = arith.cmpi slt, %0, %6 : vector<256x32xi32>
    %8 = arith.andi %4, %7 : vector<256x32xi1>
    %9 = arith.extui %8 : vector<256x32xi1> to vector<256x32xi32>
    %10 = arith.sitofp %9 : vector<256x32xi32> to vector<256x32xf32>
    %11 = tpu.iota {dimensions = array<i32: 0>} : vector<32x256xi32>
    %12 = tpu.iota {dimensions = array<i32: 1>} : vector<32x256xi32>
    %c8_i32_1 = arith.constant 8 : i32
    %13 = vector.broadcast %c8_i32_1 : i32 to vector<32x256xi32>
    %14 = arith.muli %11, %13 : vector<32x256xi32>
    %15 = arith.cmpi sge, %12, %14 : vector<32x256xi32>
    %c8_i32_2 = arith.constant 8 : i32
    %16 = vector.broadcast %c8_i32_2 : i32 to vector<32x256xi32>
    %17 = arith.addi %14, %16 : vector<32x256xi32>
    %18 = arith.cmpi slt, %12, %17 : vector<32x256xi32>
    %19 = arith.andi %15, %18 : vector<32x256xi1>
    %20 = arith.extui %19 : vector<32x256xi1> to vector<32x256xi32>
    %21 = arith.sitofp %20 : vector<32x256xi32> to vector<32x256xf32>
    %22 = arith.sitofp %1 : vector<256x32xi32> to vector<256x32xf32>
    %23 = arith.mulf %10, %22 : vector<256x32xf32>
    %cst = arith.constant dense<0.000000e+00> : vector<256xf32>
    %24 = vector.multi_reduction <add>, %23, %cst [1] : vector<256x32xf32> to vector<256xf32>
    %25 = vector.shape_cast %24 : vector<256xf32> to vector<256x1xf32>
    %26 = tpu.iota {dimensions = array<i32: 0>} : vector<256x1xi32>
    %27 = arith.sitofp %26 : vector<256x1xi32> to vector<256x1xf32>
    %cst_3 = arith.constant 8.000000e+00 : f32
    %28 = vector.broadcast %cst_3 : f32 to vector<256x1xf32>
    %29 = arith.mulf %28, %25 : vector<256x1xf32>
    %30 = arith.subf %27, %29 : vector<256x1xf32>
    %31 = tpu.iota {dimensions = array<i32: 1>} : vector<256x8xi32>
    %32 = arith.sitofp %31 : vector<256x8xi32> to vector<256x8xf32>
    %33 = vector.broadcast %30 : vector<256x1xf32> to vector<256x8xf32>
    %34 = arith.cmpf oeq, %32, %33 : vector<256x8xf32>
    %35 = arith.extui %34 : vector<256x8xi1> to vector<256x8xi32>
    %36 = arith.sitofp %35 : vector<256x8xi32> to vector<256x8xf32>
    %c0 = arith.constant 0 : index
    %c0_4 = arith.constant 0 : index
    %37 = vector.load %arg2[%c0, %c0_4] : memref<32x32xf32, #tpu.memory_space<vmem>>, vector<32x32xf32>
    %cst_5 = arith.constant dense<0.000000e+00> : vector<256x32xf32>
    %38 = tpu.matmul %10, %37, %cst_5 {dimension_numbers = #tpu.dot_dimension_numbers<[1], [0], [0], [1], [0, 0, 1, 1], [], []>} : vector<256x32xf32>, vector<32x32xf32>, vector<256x32xf32> -> vector<256x32xf32>
    %c0_6 = arith.constant 0 : index
    %c0_7 = arith.constant 0 : index
    %39 = vector.load %arg1[%c0_6, %c0_7] : memref<256x32xf32, #tpu.memory_space<vmem>>, vector<256x32xf32>
    %c0_8 = arith.constant 0 : index
    %c0_9 = arith.constant 0 : index
    %40 = vector.load %arg3[%c0_8, %c0_9] : memref<32x32xf32, #tpu.memory_space<vmem>>, vector<32x32xf32>
    %cst_10 = arith.constant dense<0.000000e+00> : vector<256x32xf32>
    %41 = tpu.matmul %39, %40, %cst_10 {dimension_numbers = #tpu.dot_dimension_numbers<[1], [0], [0], [1], [0, 0, 1, 1], [], []>} : vector<256x32xf32>, vector<32x32xf32>, vector<256x32xf32> -> vector<256x32xf32>
    %42 = arith.addf %41, %38 : vector<256x32xf32>
    %43 = math.tanh %42 : vector<256x32xf32>
    %c0_11 = arith.constant 0 : index
    %c0_12 = arith.constant 0 : index
    %44 = vector.load %arg4[%c0_11, %c0_12] : memref<32x1xf32, #tpu.memory_space<vmem>>, vector<32x1xf32>
    %cst_13 = arith.constant dense<0.000000e+00> : vector<256x1xf32>
    %45 = tpu.matmul %43, %44, %cst_13 {dimension_numbers = #tpu.dot_dimension_numbers<[1], [0], [0], [1], [0, 0, 1, 1], [], []>} : vector<256x32xf32>, vector<32x1xf32>, vector<256x1xf32> -> vector<256x1xf32>
    %46 = vector.broadcast %45 : vector<256x1xf32> to vector<256x8xf32>
    %47 = arith.mulf %46, %36 : vector<256x8xf32>
    %cst_14 = arith.constant dense<0.000000e+00> : vector<32x8xf32>
    %48 = tpu.matmul %21, %47, %cst_14 {dimension_numbers = #tpu.dot_dimension_numbers<[1], [0], [0], [1], [0, 0, 1, 1], [], []>} : vector<32x256xf32>, vector<256x8xf32>, vector<32x8xf32> -> vector<32x8xf32>
    %cst_15 = arith.constant dense<0xFF800000> : vector<32xf32>
    %49 = vector.multi_reduction <maximumf>, %48, %cst_15 [1] : vector<32x8xf32> to vector<32xf32>
    %50 = vector.shape_cast %49 : vector<32xf32> to vector<32x1xf32>
    %51 = vector.broadcast %50 : vector<32x1xf32> to vector<32x8xf32>
    %52 = arith.subf %48, %51 : vector<32x8xf32>
    %53 = math.exp %52 : vector<32x8xf32>
    %cst_16 = arith.constant dense<0.000000e+00> : vector<32xf32>
    %54 = vector.multi_reduction <add>, %53, %cst_16 [1] : vector<32x8xf32> to vector<32xf32>
    %55 = vector.shape_cast %54 : vector<32xf32> to vector<32x1xf32>
    %56 = tpu.reciprocal %55 {approx = true} : vector<32x1xf32> -> vector<32x1xf32>
    %57 = arith.mulf %55, %56 : vector<32x1xf32>
    %cst_17 = arith.constant 2.000000e+00 : f32
    %58 = vector.broadcast %cst_17 : f32 to vector<32x1xf32>
    %59 = arith.subf %58, %57 : vector<32x1xf32>
    %60 = arith.mulf %56, %59 : vector<32x1xf32>
    %61 = vector.broadcast %60 : vector<32x1xf32> to vector<32x8xf32>
    %62 = arith.mulf %53, %61 : vector<32x8xf32>
    %c0_18 = arith.constant 0 : index
    %c0_19 = arith.constant 0 : index
    %63 = vector.load %arg5[%c0_18, %c0_19] : memref<32x8xf32, #tpu.memory_space<vmem>>, vector<32x8xf32>
    tpu.vector_store %arg5[%c0_18, %c0_19], %62 {strides = array<i32>} : memref<32x8xf32, #tpu.memory_space<vmem>>, vector<32x8xf32>,
    return
  }
  func.func @transform_0(%arg0: i32) -> (i32, i32) {
    %c0_i32 = arith.constant 0 : i32
    %c0_i32_0 = arith.constant 0 : i32
    return %arg0, %c0_i32 : i32, i32
  }
  func.func @transform_1(%arg0: i32) -> (i32, i32) {
    %c0_i32 = arith.constant 0 : i32
    %c0_i32_0 = arith.constant 0 : i32
    return %arg0, %c0_i32 : i32, i32
  }
  func.func @transform_2(%arg0: i32) -> (i32, i32) {
    %c0_i32 = arith.constant 0 : i32
    %c0_i32_0 = arith.constant 0 : i32
    %c0_i32_1 = arith.constant 0 : i32
    return %c0_i32, %c0_i32_0 : i32, i32
  }
  func.func @transform_3(%arg0: i32) -> (i32, i32) {
    %c0_i32 = arith.constant 0 : i32
    %c0_i32_0 = arith.constant 0 : i32
    %c0_i32_1 = arith.constant 0 : i32
    return %c0_i32, %c0_i32_0 : i32, i32
  }
  func.func @transform_4(%arg0: i32) -> (i32, i32) {
    %c0_i32 = arith.constant 0 : i32
    %c0_i32_0 = arith.constant 0 : i32
    return %arg0, %c0_i32 : i32, i32
  }
}

</mosaic_0001>

<llo_original>
// kernel: tpu_custom_call.1
$region0: #{tpu_custom_call.1}
  #allocation0 [shape = 'u32[]', space=smem, size = 0x4, offset = 0x4, fixed_abs, tag = 'smem constant byte address 0x4 - core index']
  #allocation1 [shape = 'u32[144,128]{1,0:T(1,128)}', space=vmem, size = 0x12000, scoped, tag = 'internal scratch']
  %s0 = inlined_call_operand.vmem [shape: f32[512,32], index: 0, kind: input, shape index: {}]
  %s1 = inlined_call_operand.vmem [shape: f32[64,32], index: 1, kind: input, shape index: {}]
  %s2 = inlined_call_operand.vmem [shape: f32[32,32], index: 2, kind: input, shape index: {}]
  %s3 = inlined_call_operand.vmem [shape: f32[32,1], index: 3, kind: input, shape index: {}]
  %s4 = inlined_call_operand.vmem [shape: f32[64,8], index: 4, kind: output, shape index: {}]
  %s5 = sld [smem:[#allocation0]]
  $region49: #{tpu_custom_call.1} parent=0
    _
  %s7 = ssub.s32 1, %s5
  %s8 = scalar_select 0, %s7, %s5
  loop: start=0, step=1, limit=4
  $region2: #{tpu_custom_call.1} parent=0 // loop_pre_header
    _
  $region3: #{tpu_custom_call.1} parent=0 // loop_header
    %s10 = sphi 0, %s14
    %p11 = scmp.ge.s32.totalorder %s10, 4
    %s20 = sphi 0, %s22
    %s23 = sphi 0, %s20
    %s24 = sphi 0, %s23
    %s40 = sphi 0, %s24
    %s46 = sphi 0, %s48
    %s49 = sphi 0, %s46
    %s50 = sphi 0, %s49
    %s66 = sphi 0, %s50
    %s70 = sphi 0, %s70
    %s72 = sphi 0, %s70
    %s73 = sphi 0, %s72
    %s87 = sphi 0, %s73
    %s91 = sphi 0, %s91
    %s93 = sphi 0, %s91
    %s94 = sphi 0, %s93
    %s108 = sphi 0, %s94
    %s114 = sphi 0, %s116
    %s117 = sphi 0, %s114
    %s118 = sphi 0, %s117
    %s134 = sphi 0, %s118
  $region4: #{tpu_custom_call.1} parent=0 // loop_header_branch
    %13 = sbr.rel (%p11) target = $region8
  $region5: #{tpu_custom_call.1} parent=0 // loop_body
    %s15 = ssub.s32 %s10, 1
    %s16 = ssub.s32 %s10, 2
    %s17 = sadd.s32 %s10, 1
    %s18 = ssub.s32 %s10, %s17
    %p19 = scmp.eq.s32.totalorder %s18, 0
    %s21 = sadd.s32 %s20, 1
    %s22 = scalar_select %p19, %s20, %s21
    %p25 = pneg %p19
    %p26 = scmp.eq.s32.totalorder %s10, 1
    %p27 = por %p25, %p26
    %p28 = scmp.ne.s32.totalorder %s20, %s23
    %p29 = scmp.eq.s32.totalorder %s10, 0
    %p30 = por %p28, %p29
    %p31 = scmp.ne.s32.totalorder %s20, %s23
    %p32 = scmp.eq.s32.totalorder %s15, 1
    %p33 = por %p31, %p32
    %p34 = scmp.ne.s32.totalorder %s23, %s24
    %p35 = scmp.eq.s32.totalorder %s15, 0
    %p36 = por %p34, %p35
    %p37 = scmp.ne.s32.totalorder %s23, %s24
    %p38 = scmp.eq.s32.totalorder %s16, 1
    %p39 = por %p37, %p38
    %p41 = scmp.ne.s32.totalorder %s24, %s40
    %p42 = scmp.eq.s32.totalorder %s16, 0
    %p43 = por %p41, %p42
    %s44 = ssub.s32 %s10, %s17
    %p45 = scmp.eq.s32.totalorder %s44, 0
    %s47 = sadd.s32 %s46, 1
    %s48 = scalar_select %p45, %s46, %s47
    %p51 = pneg %p45
    %p52 = scmp.eq.s32.totalorder %s10, 1
    %p53 = por %p51, %p52
    %p54 = scmp.ne.s32.totalorder %s46, %s49
    %p55 = scmp.eq.s32.totalorder %s10, 0
    %p56 = por %p54, %p55
    %p57 = scmp.ne.s32.totalorder %s46, %s49
    %p58 = scmp.eq.s32.totalorder %s15, 1
    %p59 = por %p57, %p58
    %p60 = scmp.ne.s32.totalorder %s49, %s50
    %p61 = scmp.eq.s32.totalorder %s15, 0
    %p62 = por %p60, %p61
    %p63 = scmp.ne.s32.totalorder %s49, %s50
    %p64 = scmp.eq.s32.totalorder %s16, 1
    %p65 = por %p63, %p64
    %p67 = scmp.ne.s32.totalorder %s50, %s66
    %p68 = scmp.eq.s32.totalorder %s16, 0
    %p69 = por %p67, %p68
    %s71 = sadd.s32 %s70, 1
    %p74 = scmp.eq.s32.totalorder %s10, 1
    %p75 = scmp.ne.s32.totalorder %s70, %s72
    %p76 = scmp.eq.s32.totalorder %s10, 0
    %p77 = por %p75, %p76
    %p78 = scmp.ne.s32.totalorder %s70, %s72
    %p79 = scmp.eq.s32.totalorder %s15, 1
    %p80 = por %p78, %p79
    %p81 = scmp.ne.s32.totalorder %s72, %s73
    %p82 = scmp.eq.s32.totalorder %s15, 0
    %p83 = por %p81, %p82
    %p84 = scmp.ne.s32.totalorder %s72, %s73
    %p85 = scmp.eq.s32.totalorder %s16, 1
    %p86 = por %p84, %p85
    %p88 = scmp.ne.s32.totalorder %s73, %s87
    %p89 = scmp.eq.s32.totalorder %s16, 0
    %p90 = por %p88, %p89
    %s92 = sadd.s32 %s91, 1
    %p95 = scmp.eq.s32.totalorder %s10, 1
    %p96 = scmp.ne.s32.totalorder %s91, %s93
    %p97 = scmp.eq.s32.totalorder %s10, 0
    %p98 = por %p96, %p97
    %p99 = scmp.ne.s32.totalorder %s91, %s93
    %p100 = scmp.eq.s32.totalorder %s15, 1
    %p101 = por %p99, %p100
    %p102 = scmp.ne.s32.totalorder %s93, %s94
    %p103 = scmp.eq.s32.totalorder %s15, 0
    %p104 = por %p102, %p103
    %p105 = scmp.ne.s32.totalorder %s93, %s94
    %p106 = scmp.eq.s32.totalorder %s16, 1
    %p107 = por %p105, %p106
    %p109 = scmp.ne.s32.totalorder %s94, %s108
    %p110 = scmp.eq.s32.totalorder %s16, 0
    %p111 = por %p109, %p110
    %s112 = ssub.s32 %s10, %s17
    %p113 = scmp.eq.s32.totalorder %s112, 0
    %s115 = sadd.s32 %s114, 1
    %s116 = scalar_select %p113, %s114, %s115
    %p119 = pneg %p113
    %p120 = scmp.eq.s32.totalorder %s10, 1
    %p121 = por %p119, %p120
    %p122 = scmp.ne.s32.totalorder %s114, %s117
    %p123 = scmp.eq.s32.totalorder %s10, 0
    %p124 = por %p122, %p123
    %p125 = scmp.ne.s32.totalorder %s114, %s117
    %p126 = scmp.eq.s32.totalorder %s15, 1
    %p127 = por %p125, %p126
    %p128 = scmp.ne.s32.totalorder %s117, %s118
    %p129 = scmp.eq.s32.totalorder %s15, 0
    %p130 = por %p128, %p129
    %p131 = scmp.ne.s32.totalorder %s117, %s118
    %p132 = scmp.eq.s32.totalorder %s16, 1
    %p133 = por %p131, %p132
    %p135 = scmp.ne.s32.totalorder %s118, %s134
    %p136 = scmp.eq.s32.totalorder %s16, 0
    %p137 = por %p135, %p136
    %p138 = scmp.le.s32.totalorder 1, %s10
    %p139 = scmp.lt.s32.totalorder %s10, 3
    %p140 = pnand %p138, %p139
    %p141 = pneg %p140
    // Predicated region
    $region9: #{tpu_custom_call.1} parent=5 // pred_check
      _
    $region10: #{tpu_custom_call.1} parent=5 // pred_check_branch
      %143 = sbr.rel (%p140) target = $region12
    $region11: #{tpu_custom_call.1} parent=5 // pred_region
      %s144 = ssub.s32 %s10, 1
      // Predicated region
      $region13: #{tpu_custom_call.1} parent=11 // pred_check
        %p145 = pneg %p83
      $region14: #{tpu_custom_call.1} parent=11 // pred_check_branch
        %147 = sbr.rel (%p145) target = $region16
      $region15: #{tpu_custom_call.1} parent=11 // pred_region
        _
      $region16: #{tpu_custom_call.1} parent=11 // pred_fallthru
        _
      // Predicated region
      $region17: #{tpu_custom_call.1} parent=11 // pred_check
        %p148 = pneg %p104
      $region18: #{tpu_custom_call.1} parent=11 // pred_check_branch
        %150 = sbr.rel (%p148) target = $region20
      $region19: #{tpu_custom_call.1} parent=11 // pred_region
        _
      $region20: #{tpu_custom_call.1} parent=11 // pred_fallthru
        _
    $region12: #{tpu_custom_call.1} parent=5 // pred_fallthru
      _
    %p151 = scmp.lt.s32.totalorder %s10, 2
    // Predicated region
    $region21: #{tpu_custom_call.1} parent=5 // pred_check
      %p152 = pneg %p151
    $region22: #{tpu_custom_call.1} parent=5 // pred_check_branch
      %154 = sbr.rel (%p152) target = $region24
    $region23: #{tpu_custom_call.1} parent=5 // pred_region
      // Predicated region
      $region25: #{tpu_custom_call.1} parent=23 // pred_check
        %p155 = pneg %p30
      $region26: #{tpu_custom_call.1} parent=23 // pred_check_branch
        %157 = sbr.rel (%p155) target = $region28
      $region27: #{tpu_custom_call.1} parent=23 // pred_region
        %s158 = smul.u32 32, %s10
        %p159 = scmp.lt.s32.totalorder %s158, 63
        %s160 = scalar_select %p159, %s158, 63
        %s161 = smul.addr %s160, 8
        %s162 = scalar_lea.vmem %s0, %s161
        %s163 = smul.u32 32, %s10
      $region28: #{tpu_custom_call.1} parent=23 // pred_fallthru
        _
      // Predicated region
      $region29: #{tpu_custom_call.1} parent=23 // pred_check
        %p164 = pneg %p56
      $region30: #{tpu_custom_call.1} parent=23 // pred_check_branch
        %166 = sbr.rel (%p164) target = $region32
      $region31: #{tpu_custom_call.1} parent=23 // pred_region
        %s167 = smul.u32 4, %s10
        %p168 = scmp.lt.s32.totalorder %s167, 7
        %s169 = scalar_select %p168, %s167, 7
        %s170 = smul.addr %s169, 8
        %s171 = scalar_lea.vmem %s1, %s170
        %s172 = smul.u32 4, %s10
      $region32: #{tpu_custom_call.1} parent=23 // pred_fallthru
        _
    $region24: #{tpu_custom_call.1} parent=5 // pred_fallthru
      _
    %p173 = scmp.le.s32.totalorder 1, %s10
    %p174 = scmp.lt.s32.totalorder %s10, 3
    %p175 = pnand %p173, %p174
    %p176 = pneg %p175
    // Predicated region
    $region33: #{tpu_custom_call.1} parent=5 // pred_check
      _
    $region34: #{tpu_custom_call.1} parent=5 // pred_check_branch
      %178 = sbr.rel (%p175) target = $region36
    $region35: #{tpu_custom_call.1} parent=5 // pred_region
      %s179 = ssub.s32 %s10, 1
      %s180 = smul.u32 32, %s15
      %p181 = scmp.lt.s32.totalorder %s180, 63
      %s182 = scalar_select %p181, %s180, 63
      %s183 = smul.addr %s182, 8
      %s184 = scalar_lea.vmem %s0, %s183
      %p185 = pneg %p36
      %p186 = pneg %p33
      %s187 = smul.u32 4, %s15
      %p188 = scmp.lt.s32.totalorder %s187, 7
      %s189 = scalar_select %p188, %s187, 7
      %s190 = smul.addr %s189, 8
      %s191 = scalar_lea.vmem %s1, %s190
      %p192 = pneg %p62
      %p193 = pneg %p59
      %p194 = pneg %p83
      %p195 = pneg %p80
      %p196 = pneg %p104
      %p197 = pneg %p101
      %p198 = pneg %p130
      %p199 = pneg %p127
      %s200 = smul.u32 4, %s15
      %p201 = scmp.lt.s32.totalorder %s200, 7
      %s202 = scalar_select %p201, %s200, 7
      %s203 = smul.addr %s202, 8
      %s204 = scalar_lea.vmem %s4, %s203
      %s205 = smul.u32 32, %s15
      %p206 = scmp.lt.s32.totalorder %s205, 63
      %s207 = scalar_select %p206, %s205, 63
      %s208 = smul.addr %s207, 8
      %s209 = scalar_lea.vmem %s0, %s208
      %s210 = smul.u32 32, %s15
      %s211 = smul.u32 4, %s15
      %p212 = scmp.lt.s32.totalorder %s211, 7
      %s213 = scalar_select %p212, %s211, 7
      %s214 = smul.addr %s213, 8
      %s215 = scalar_lea.vmem %s1, %s214
      %s216 = smul.u32 4, %s15
      %s217 = smul.u32 4, %s15
      %p218 = scmp.lt.s32.totalorder %s217, 7
      %s219 = scalar_select %p218, %s217, 7
      %s220 = smul.addr %s219, 8
      %s221 = scalar_lea.vmem %s4, %s220
      %s222 = smul.u32 4, %s15
      %v223 = vlaneseq
      %v224 = vshrl.u32 %v223, 7
      %v225 = vadd.s32 %v224, 8
      %v226 = vadd.s32 %v224, 16
      %v227 = vadd.s32 %v224, 24
      %v228 = vadd.s32 %v224, 32
      %v229 = vadd.s32 %v224, 40
      %v230 = vadd.s32 %v224, 48
      %v231 = vadd.s32 %v224, 56
      %v232 = vadd.s32 %v224, 64
      %v233 = vadd.s32 %v224, 72
      %v234 = vadd.s32 %v224, 80
      %v235 = vadd.s32 %v224, 88
      %v236 = vadd.s32 %v224, 96
      %v237 = vadd.s32 %v224, 104
      %v238 = vadd.s32 %v224, 112
      %v239 = vadd.s32 %v224, 120
      %v240 = vadd.s32 %v224, 128
      %v241 = vadd.s32 %v224, 136
      %v242 = vadd.s32 %v224, 144
      %v243 = vadd.s32 %v224, 152
      %v244 = vadd.s32 %v224, 160
      %v245 = vadd.s32 %v224, 168
      %v246 = vadd.s32 %v224, 176
      %v247 = vadd.s32 %v224, 184
      %v248 = vadd.s32 %v224, 192
      %v249 = vadd.s32 %v224, 200
      %v250 = vadd.s32 %v224, 208
      %v251 = vadd.s32 %v224, 216
      %v252 = vadd.s32 %v224, 224
      %v253 = vadd.s32 %v224, 232
      %v254 = vadd.s32 %v224, 240
      %v255 = vadd.s32 %v224, 248
      %v256 = vlaneseq
      %v257 = vand.u32 %v256, 127
      %v258 = vmul.u32 %v257, 8
      %vm259 = vcmp.ge.s32.totalorder %v224, %v258
      %vm260 = vcmp.ge.s32.totalorder %v225, %v258
      %vm261 = vcmp.ge.s32.totalorder %v226, %v258
      %vm262 = vcmp.ge.s32.totalorder %v227, %v258
      %vm263 = vcmp.ge.s32.totalorder %v228, %v258
      %vm264 = vcmp.ge.s32.totalorder %v229, %v258
      %vm265 = vcmp.ge.s32.totalorder %v230, %v258
      %vm266 = vcmp.ge.s32.totalorder %v231, %v258
      %vm267 = vcmp.ge.s32.totalorder %v232, %v258
      %vm268 = vcmp.ge.s32.totalorder %v233, %v258
      %vm269 = vcmp.ge.s32.totalorder %v234, %v258
      %vm270 = vcmp.ge.s32.totalorder %v235, %v258
      %vm271 = vcmp.ge.s32.totalorder %v236, %v258
      %vm272 = vcmp.ge.s32.totalorder %v237, %v258
      %vm273 = vcmp.ge.s32.totalorder %v238, %v258
      %vm274 = vcmp.ge.s32.totalorder %v239, %v258
      %vm275 = vcmp.ge.s32.totalorder %v240, %v258
      %vm276 = vcmp.ge.s32.totalorder %v241, %v258
      %vm277 = vcmp.ge.s32.totalorder %v242, %v258
      %vm278 = vcmp.ge.s32.totalorder %v243, %v258
      %vm279 = vcmp.ge.s32.totalorder %v244, %v258
      %vm280 = vcmp.ge.s32.totalorder %v245, %v258
      %vm281 = vcmp.ge.s32.totalorder %v246, %v258
      %vm282 = vcmp.ge.s32.totalorder %v247, %v258
      %vm283 = vcmp.ge.s32.totalorder %v248, %v258
      %vm284 = vcmp.ge.s32.totalorder %v249, %v258
      %vm285 = vcmp.ge.s32.totalorder %v250, %v258
      %vm286 = vcmp.ge.s32.totalorder %v251, %v258
      %vm287 = vcmp.ge.s32.totalorder %v252, %v258
      %vm288 = vcmp.ge.s32.totalorder %v253, %v258
      %vm289 = vcmp.ge.s32.totalorder %v254, %v258
      %vm290 = vcmp.ge.s32.totalorder %v255, %v258
      %v291 = vadd.s32 %v258, 8
      %vm292 = vcmp.lt.s32.totalorder %v224, %v291
      %vm293 = vcmp.lt.s32.totalorder %v225, %v291
      %vm294 = vcmp.lt.s32.totalorder %v226, %v291
      %vm295 = vcmp.lt.s32.totalorder %v227, %v291
      %vm296 = vcmp.lt.s32.totalorder %v228, %v291
      %vm297 = vcmp.lt.s32.totalorder %v229, %v291
      %vm298 = vcmp.lt.s32.totalorder %v230, %v291
      %vm299 = vcmp.lt.s32.totalorder %v231, %v291
      %vm300 = vcmp.lt.s32.totalorder %v232, %v291
      %vm301 = vcmp.lt.s32.totalorder %v233, %v291
      %vm302 = vcmp.lt.s32.totalorder %v234, %v291
      %vm303 = vcmp.lt.s32.totalorder %v235, %v291
      %vm304 = vcmp.lt.s32.totalorder %v236, %v291
      %vm305 = vcmp.lt.s32.totalorder %v237, %v291
      %vm306 = vcmp.lt.s32.totalorder %v238, %v291
      %vm307 = vcmp.lt.s32.totalorder %v239, %v291
      %vm308 = vcmp.lt.s32.totalorder %v240, %v291
      %vm309 = vcmp.lt.s32.totalorder %v241, %v291
      %vm310 = vcmp.lt.s32.totalorder %v242, %v291
      %vm311 = vcmp.lt.s32.totalorder %v243, %v291
      %vm312 = vcmp.lt.s32.totalorder %v244, %v291
      %vm313 = vcmp.lt.s32.totalorder %v245, %v291
      %vm314 = vcmp.lt.s32.totalorder %v246, %v291
      %vm315 = vcmp.lt.s32.totalorder %v247, %v291
      %vm316 = vcmp.lt.s32.totalorder %v248, %v291
      %vm317 = vcmp.lt.s32.totalorder %v249, %v291
      %vm318 = vcmp.lt.s32.totalorder %v250, %v291
      %vm319 = vcmp.lt.s32.totalorder %v251, %v291
      %vm320 = vcmp.lt.s32.totalorder %v252, %v291
      %vm321 = vcmp.lt.s32.totalorder %v253, %v291
      %vm322 = vcmp.lt.s32.totalorder %v254, %v291
      %vm323 = vcmp.lt.s32.totalorder %v255, %v291
      %vm324 = vmand %vm259, %vm292
      %vm325 = vmand %vm260, %vm293
      %vm326 = vmand %vm261, %vm294
      %vm327 = vmand %vm262, %vm295
      %vm328 = vmand %vm263, %vm296
      %vm329 = vmand %vm264, %vm297
      %vm330 = vmand %vm265, %vm298
      %vm331 = vmand %vm266, %vm299
      %vm332 = vmand %vm267, %vm300
      %vm333 = vmand %vm268, %vm301
      %vm334 = vmand %vm269, %vm302
      %vm335 = vmand %vm270, %vm303
      %vm336 = vmand %vm271, %vm304
      %vm337 = vmand %vm272, %vm305
      %vm338 = vmand %vm273, %vm306
      %vm339 = vmand %vm274, %vm307
      %vm340 = vmand %vm275, %vm308
      %vm341 = vmand %vm276, %vm309
      %vm342 = vmand %vm277, %vm310
      %vm343 = vmand %vm278, %vm311
      %vm344 = vmand %vm279, %vm312
      %vm345 = vmand %vm280, %vm313
      %vm346 = vmand %vm281, %vm314
      %vm347 = vmand %vm282, %vm315
      %vm348 = vmand %vm283, %vm316
      %vm349 = vmand %vm284, %vm317
      %vm350 = vmand %vm285, %vm318
      %vm351 = vmand %vm286, %vm319
      %vm352 = vmand %vm287, %vm320
      %vm353 = vmand %vm288, %vm321
      %vm354 = vmand %vm289, %vm322
      %vm355 = vmand %vm290, %vm323
      %v356 = vsel %vm324, 1, 0
      %v357 = vsel %vm325, 1, 0
      %v358 = vsel %vm326, 1, 0
      %v359 = vsel %vm327, 1, 0
      %v360 = vsel %vm328, 1, 0
      %v361 = vsel %vm329, 1, 0
      %v362 = vsel %vm330, 1, 0
      %v363 = vsel %vm331, 1, 0
      %v364 = vsel %vm332, 1, 0
      %v365 = vsel %vm333, 1, 0
      %v366 = vsel %vm334, 1, 0
      %v367 = vsel %vm335, 1, 0
      %v368 = vsel %vm336, 1, 0
      %v369 = vsel %vm337, 1, 0
      %v370 = vsel %vm338, 1, 0
      %v371 = vsel %vm339, 1, 0
      %v372 = vsel %vm340, 1, 0
      %v373 = vsel %vm341, 1, 0
      %v374 = vsel %vm342, 1, 0
      %v375 = vsel %vm343, 1, 0
      %v376 = vsel %vm344, 1, 0
      %v377 = vsel %vm345, 1, 0
      %v378 = vsel %vm346, 1, 0
      %v379 = vsel %vm347, 1, 0
      %v380 = vsel %vm348, 1, 0
      %v381 = vsel %vm349, 1, 0
      %v382 = vsel %vm350, 1, 0
      %v383 = vsel %vm351, 1, 0
      %v384 = vsel %vm352, 1, 0
      %v385 = vsel %vm353, 1, 0
      %v386 = vsel %vm354, 1, 0
      %v387 = vsel %vm355, 1, 0
      %v388 = vcvt.s32.f32 %v356
      %v389 = vcvt.s32.f32 %v357
      %v390 = vcvt.s32.f32 %v358
      %v391 = vcvt.s32.f32 %v359
      %v392 = vcvt.s32.f32 %v360
      %v393 = vcvt.s32.f32 %v361
      %v394 = vcvt.s32.f32 %v362
      %v395 = vcvt.s32.f32 %v363
      %v396 = vcvt.s32.f32 %v364
      %v397 = vcvt.s32.f32 %v365
      %v398 = vcvt.s32.f32 %v366
      %v399 = vcvt.s32.f32 %v367
      %v400 = vcvt.s32.f32 %v368
      %v401 = vcvt.s32.f32 %v369
      %v402 = vcvt.s32.f32 %v370
      %v403 = vcvt.s32.f32 %v371
      %v404 = vcvt.s32.f32 %v372
      %v405 = vcvt.s32.f32 %v373
      %v406 = vcvt.s32.f32 %v374
      %v407 = vcvt.s32.f32 %v375
      %v408 = vcvt.s32.f32 %v376
      %v409 = vcvt.s32.f32 %v377
      %v410 = vcvt.s32.f32 %v378
      %v411 = vcvt.s32.f32 %v379
      %v412 = vcvt.s32.f32 %v380
      %v413 = vcvt.s32.f32 %v381
      %v414 = vcvt.s32.f32 %v382
      %v415 = vcvt.s32.f32 %v383
      %v416 = vcvt.s32.f32 %v384
      %v417 = vcvt.s32.f32 %v385
      %v418 = vcvt.s32.f32 %v386
      %v419 = vcvt.s32.f32 %v387
      %v420 = vadd.s32 %v257, 128
      %v421 = vmul.u32 %v224, 8
      %v422 = vmul.u32 %v225, 8
      %v423 = vmul.u32 %v226, 8
      %v424 = vmul.u32 %v227, 8
      %vm425 = vcmp.ge.s32.totalorder %v257, %v421
      %vm426 = vcmp.ge.s32.totalorder %v420, %v421
      %vm427 = vcmp.ge.s32.totalorder %v257, %v422
      %vm428 = vcmp.ge.s32.totalorder %v420, %v422
      %vm429 = vcmp.ge.s32.totalorder %v257, %v423
      %vm430 = vcmp.ge.s32.totalorder %v420, %v423
      %vm431 = vcmp.ge.s32.totalorder %v257, %v424
      %vm432 = vcmp.ge.s32.totalorder %v420, %v424
      %v433 = vadd.s32 %v421, 8
      %v434 = vadd.s32 %v422, 8
      %v435 = vadd.s32 %v423, 8
      %v436 = vadd.s32 %v424, 8
      %vm437 = vcmp.lt.s32.totalorder %v257, %v433
      %vm438 = vcmp.lt.s32.totalorder %v420, %v433
      %vm439 = vcmp.lt.s32.totalorder %v257, %v434
      %vm440 = vcmp.lt.s32.totalorder %v420, %v434
      %vm441 = vcmp.lt.s32.totalorder %v257, %v435
      %vm442 = vcmp.lt.s32.totalorder %v420, %v435
      %vm443 = vcmp.lt.s32.totalorder %v257, %v436
      %vm444 = vcmp.lt.s32.totalorder %v420, %v436
      %vm445 = vmand %vm425, %vm437
      %vm446 = vmand %vm426, %vm438
      %vm447 = vmand %vm427, %vm439
      %vm448 = vmand %vm428, %vm440
      %vm449 = vmand %vm429, %vm441
      %vm450 = vmand %vm430, %vm442
      %vm451 = vmand %vm431, %vm443
      %vm452 = vmand %vm432, %vm444
      %v453 = vsel %vm445, 1, 0
      %v454 = vsel %vm446, 1, 0
      %v455 = vsel %vm447, 1, 0
      %v456 = vsel %vm448, 1, 0
      %v457 = vsel %vm449, 1, 0
      %v458 = vsel %vm450, 1, 0
      %v459 = vsel %vm451, 1, 0
      %v460 = vsel %vm452, 1, 0
      %v461 = vcvt.s32.f32 %v453
      %v462 = vcvt.s32.f32 %v454
      %v463 = vcvt.s32.f32 %v455
      %v464 = vcvt.s32.f32 %v456
      %v465 = vcvt.s32.f32 %v457
      %v466 = vcvt.s32.f32 %v458
      %v467 = vcvt.s32.f32 %v459
      %v468 = vcvt.s32.f32 %v460
      %v469 = vcvt.s32.f32 %v257
      %v470 = vmul.f32 %v388, %v469
      %v471 = vmul.f32 %v389, %v469
      %v472 = vmul.f32 %v390, %v469
      %v473 = vmul.f32 %v391, %v469
      %v474 = vmul.f32 %v392, %v469
      %v475 = vmul.f32 %v393, %v469
      %v476 = vmul.f32 %v394, %v469
      %v477 = vmul.f32 %v395, %v469
      %v478 = vmul.f32 %v396, %v469
      %v479 = vmul.f32 %v397, %v469
      %v480 = vmul.f32 %v398, %v469
      %v481 = vmul.f32 %v399, %v469
      %v482 = vmul.f32 %v400, %v469
      %v483 = vmul.f32 %v401, %v469
      %v484 = vmul.f32 %v402, %v469
      %v485 = vmul.f32 %v403, %v469
      %v486 = vmul.f32 %v404, %v469
      %v487 = vmul.f32 %v405, %v469
      %v488 = vmul.f32 %v406, %v469
      %v489 = vmul.f32 %v407, %v469
      %v490 = vmul.f32 %v408, %v469
      %v491 = vmul.f32 %v409, %v469
      %v492 = vmul.f32 %v410, %v469
      %v493 = vmul.f32 %v411, %v469
      %v494 = vmul.f32 %v412, %v469
      %v495 = vmul.f32 %v413, %v469
      %v496 = vmul.f32 %v414, %v469
      %v497 = vmul.f32 %v415, %v469
      %v498 = vmul.f32 %v416, %v469
      %v499 = vmul.f32 %v417, %v469
      %v500 = vmul.f32 %v418, %v469
      %v501 = vmul.f32 %v419, %v469
      %vm502 = vcmask 261120
      %v503 = vsel %vm502, %v470, 0.0
      %504 = vadd.xlane.f32.xlu0 %v503
      %v505 = vpop.xlane.xlu0 %504
      %v506 = vsel %vm502, %v471, 0.0
      %507 = vadd.xlane.f32.xlu0 %v506
      %v508 = vpop.xlane.xlu0 %507
      %v509 = vsel %vm502, %v472, 0.0
      %510 = vadd.xlane.f32.xlu0 %v509
      %v511 = vpop.xlane.xlu0 %510
      %v512 = vsel %vm502, %v473, 0.0
      %513 = vadd.xlane.f32.xlu0 %v512
      %v514 = vpop.xlane.xlu0 %513
      %v515 = vsel %vm502, %v474, 0.0
      %516 = vadd.xlane.f32.xlu0 %v515
      %v517 = vpop.xlane.xlu0 %516
      %v518 = vsel %vm502, %v475, 0.0
      %519 = vadd.xlane.f32.xlu0 %v518
      %v520 = vpop.xlane.xlu0 %519
      %v521 = vsel %vm502, %v476, 0.0
      %522 = vadd.xlane.f32.xlu0 %v521
      %v523 = vpop.xlane.xlu0 %522
      %v524 = vsel %vm502, %v477, 0.0
      %525 = vadd.xlane.f32.xlu0 %v524
      %v526 = vpop.xlane.xlu0 %525
      %v527 = vsel %vm502, %v478, 0.0
      %528 = vadd.xlane.f32.xlu0 %v527
      %v529 = vpop.xlane.xlu0 %528
      %v530 = vsel %vm502, %v479, 0.0
      %531 = vadd.xlane.f32.xlu0 %v530
      %v532 = vpop.xlane.xlu0 %531
      %v533 = vsel %vm502, %v480, 0.0
      %534 = vadd.xlane.f32.xlu0 %v533
      %v535 = vpop.xlane.xlu0 %534
      %v536 = vsel %vm502, %v481, 0.0
      %537 = vadd.xlane.f32.xlu0 %v536
      %v538 = vpop.xlane.xlu0 %537
      %v539 = vsel %vm502, %v482, 0.0
      %540 = vadd.xlane.f32.xlu0 %v539
      %v541 = vpop.xlane.xlu0 %540
      %v542 = vsel %vm502, %v483, 0.0
      %543 = vadd.xlane.f32.xlu0 %v542
      %v544 = vpop.xlane.xlu0 %543
      %v545 = vsel %vm502, %v484, 0.0
      %546 = vadd.xlane.f32.xlu0 %v545
      %v547 = vpop.xlane.xlu0 %546
      %v548 = vsel %vm502, %v485, 0.0
      %549 = vadd.xlane.f32.xlu0 %v548
      %v550 = vpop.xlane.xlu0 %549
      %v551 = vsel %vm502, %v486, 0.0
      %552 = vadd.xlane.f32.xlu0 %v551
      %v553 = vpop.xlane.xlu0 %552
      %v554 = vsel %vm502, %v487, 0.0
      %555 = vadd.xlane.f32.xlu0 %v554
      %v556 = vpop.xlane.xlu0 %555
      %v557 = vsel %vm502, %v488, 0.0
      %558 = vadd.xlane.f32.xlu0 %v557
      %v559 = vpop.xlane.xlu0 %558
      %v560 = vsel %vm502, %v489, 0.0
      %561 = vadd.xlane.f32.xlu0 %v560
      %v562 = vpop.xlane.xlu0 %561
      %v563 = vsel %vm502, %v490, 0.0
      %564 = vadd.xlane.f32.xlu0 %v563
      %v565 = vpop.xlane.xlu0 %564
      %v566 = vsel %vm502, %v491, 0.0
      %567 = vadd.xlane.f32.xlu0 %v566
      %v568 = vpop.xlane.xlu0 %567
      %v569 = vsel %vm502, %v492, 0.0
      %570 = vadd.xlane.f32.xlu0 %v569
      %v571 = vpop.xlane.xlu0 %570
      %v572 = vsel %vm502, %v493, 0.0
      %573 = vadd.xlane.f32.xlu0 %v572
      %v574 = vpop.xlane.xlu0 %573
      %v575 = vsel %vm502, %v494, 0.0
      %576 = vadd.xlane.f32.xlu0 %v575
      %v577 = vpop.xlane.xlu0 %576
      %v578 = vsel %vm502, %v495, 0.0
      %579 = vadd.xlane.f32.xlu0 %v578
      %v580 = vpop.xlane.xlu0 %579
      %v581 = vsel %vm502, %v496, 0.0
      %582 = vadd.xlane.f32.xlu0 %v581
      %v583 = vpop.xlane.xlu0 %582
      %v584 = vsel %vm502, %v497, 0.0
      %585 = vadd.xlane.f32.xlu0 %v584
      %v586 = vpop.xlane.xlu0 %585
      %v587 = vsel %vm502, %v498, 0.0
      %588 = vadd.xlane.f32.xlu0 %v587
      %v589 = vpop.xlane.xlu0 %588
      %v590 = vsel %vm502, %v499, 0.0
      %591 = vadd.xlane.f32.xlu0 %v590
      %v592 = vpop.xlane.xlu0 %591
      %v593 = vsel %vm502, %v500, 0.0
      %594 = vadd.xlane.f32.xlu0 %v593
      %v595 = vpop.xlane.xlu0 %594
      %v596 = vsel %vm502, %v501, 0.0
      %597 = vadd.xlane.f32.xlu0 %v596
      %v598 = vpop.xlane.xlu0 %597
      %v599 = vcvt.s32.f32 %v224
      %v600 = vcvt.s32.f32 %v225
      %v601 = vcvt.s32.f32 %v226
      %v602 = vcvt.s32.f32 %v227
      %v603 = vcvt.s32.f32 %v228
      %v604 = vcvt.s32.f32 %v229
      %v605 = vcvt.s32.f32 %v230
      %v606 = vcvt.s32.f32 %v231
      %v607 = vcvt.s32.f32 %v232
      %v608 = vcvt.s32.f32 %v233
      %v609 = vcvt.s32.f32 %v234
      %v610 = vcvt.s32.f32 %v235
      %v611 = vcvt.s32.f32 %v236
      %v612 = vcvt.s32.f32 %v237
      %v613 = vcvt.s32.f32 %v238
      %v614 = vcvt.s32.f32 %v239
      %v615 = vcvt.s32.f32 %v240
      %v616 = vcvt.s32.f32 %v241
      %v617 = vcvt.s32.f32 %v242
      %v618 = vcvt.s32.f32 %v243
      %v619 = vcvt.s32.f32 %v244
      %v620 = vcvt.s32.f32 %v245
      %v621 = vcvt.s32.f32 %v246
      %v622 = vcvt.s32.f32 %v247
      %v623 = vcvt.s32.f32 %v248
      %v624 = vcvt.s32.f32 %v249
      %v625 = vcvt.s32.f32 %v250
      %v626 = vcvt.s32.f32 %v251
      %v627 = vcvt.s32.f32 %v252
      %v628 = vcvt.s32.f32 %v253
      %v629 = vcvt.s32.f32 %v254
      %v630 = vcvt.s32.f32 %v255
      %v631 = vmul.f32 %v505, 8.0
      %v632 = vmul.f32 %v508, 8.0
      %v633 = vmul.f32 %v511, 8.0
      %v634 = vmul.f32 %v514, 8.0
      %v635 = vmul.f32 %v517, 8.0
      %v636 = vmul.f32 %v520, 8.0
      %v637 = vmul.f32 %v523, 8.0
      %v638 = vmul.f32 %v526, 8.0
      %v639 = vmul.f32 %v529, 8.0
      %v640 = vmul.f32 %v532, 8.0
      %v641 = vmul.f32 %v535, 8.0
      %v642 = vmul.f32 %v538, 8.0
      %v643 = vmul.f32 %v541, 8.0
      %v644 = vmul.f32 %v544, 8.0
      %v645 = vmul.f32 %v547, 8.0
      %v646 = vmul.f32 %v550, 8.0
      %v647 = vmul.f32 %v553, 8.0
      %v648 = vmul.f32 %v556, 8.0
      %v649 = vmul.f32 %v559, 8.0
      %v650 = vmul.f32 %v562, 8.0
      %v651 = vmul.f32 %v565, 8.0
      %v652 = vmul.f32 %v568, 8.0
      %v653 = vmul.f32 %v571, 8.0
      %v654 = vmul.f32 %v574, 8.0
      %v655 = vmul.f32 %v577, 8.0
      %v656 = vmul.f32 %v580, 8.0
      %v657 = vmul.f32 %v583, 8.0
      %v658 = vmul.f32 %v586, 8.0
      %v659 = vmul.f32 %v589, 8.0
      %v660 = vmul.f32 %v592, 8.0
      %v661 = vmul.f32 %v595, 8.0
      %v662 = vmul.f32 %v598, 8.0
      %v663 = vsub.f32 %v599, %v631
      %v664 = vsub.f32 %v600, %v632
      %v665 = vsub.f32 %v601, %v633
      %v666 = vsub.f32 %v602, %v634
      %v667 = vsub.f32 %v603, %v635
      %v668 = vsub.f32 %v604, %v636
      %v669 = vsub.f32 %v605, %v637
      %v670 = vsub.f32 %v606, %v638
      %v671 = vsub.f32 %v607, %v639
      %v672 = vsub.f32 %v608, %v640
      %v673 = vsub.f32 %v609, %v641
      %v674 = vsub.f32 %v610, %v642
      %v675 = vsub.f32 %v611, %v643
      %v676 = vsub.f32 %v612, %v644
      %v677 = vsub.f32 %v613, %v645
      %v678 = vsub.f32 %v614, %v646
      %v679 = vsub.f32 %v615, %v647
      %v680 = vsub.f32 %v616, %v648
      %v681 = vsub.f32 %v617, %v649
      %v682 = vsub.f32 %v618, %v650
      %v683 = vsub.f32 %v619, %v651
      %v684 = vsub.f32 %v620, %v652
      %v685 = vsub.f32 %v621, %v653
      %v686 = vsub.f32 %v622, %v654
      %v687 = vsub.f32 %v623, %v655
      %v688 = vsub.f32 %v624, %v656
      %v689 = vsub.f32 %v625, %v657
      %v690 = vsub.f32 %v626, %v658
      %v691 = vsub.f32 %v627, %v659
      %v692 = vsub.f32 %v628, %v660
      %v693 = vsub.f32 %v629, %v661
      %v694 = vsub.f32 %v630, %v662
      %vm695 = vcmp.eq.f32.partialorder %v469, %v663
      %vm696 = vcmp.eq.f32.partialorder %v469, %v664
      %vm697 = vcmp.eq.f32.partialorder %v469, %v665
      %vm698 = vcmp.eq.f32.partialorder %v469, %v666
      %vm699 = vcmp.eq.f32.partialorder %v469, %v667
      %vm700 = vcmp.eq.f32.partialorder %v469, %v668
      %vm701 = vcmp.eq.f32.partialorder %v469, %v669
      %vm702 = vcmp.eq.f32.partialorder %v469, %v670
      %vm703 = vcmp.eq.f32.partialorder %v469, %v671
      %vm704 = vcmp.eq.f32.partialorder %v469, %v672
      %vm705 = vcmp.eq.f32.partialorder %v469, %v673
      %vm706 = vcmp.eq.f32.partialorder %v469, %v674
      %vm707 = vcmp.eq.f32.partialorder %v469, %v675
      %vm708 = vcmp.eq.f32.partialorder %v469, %v676
      %vm709 = vcmp.eq.f32.partialorder %v469, %v677
      %vm710 = vcmp.eq.f32.partialorder %v469, %v678
      %vm711 = vcmp.eq.f32.partialorder %v469, %v679
      %vm712 = vcmp.eq.f32.partialorder %v469, %v680
      %vm713 = vcmp.eq.f32.partialorder %v469, %v681
      %vm714 = vcmp.eq.f32.partialorder %v469, %v682
      %vm715 = vcmp.eq.f32.partialorder %v469, %v683
      %vm716 = vcmp.eq.f32.partialorder %v469, %v684
      %vm717 = vcmp.eq.f32.partialorder %v469, %v685
      %vm718 = vcmp.eq.f32.partialorder %v469, %v686
      %vm719 = vcmp.eq.f32.partialorder %v469, %v687
      %vm720 = vcmp.eq.f32.partialorder %v469, %v688
      %vm721 = vcmp.eq.f32.partialorder %v469, %v689
      %vm722 = vcmp.eq.f32.partialorder %v469, %v690
      %vm723 = vcmp.eq.f32.partialorder %v469, %v691
      %vm724 = vcmp.eq.f32.partialorder %v469, %v692
      %vm725 = vcmp.eq.f32.partialorder %v469, %v693
      %vm726 = vcmp.eq.f32.partialorder %v469, %v694
      %v727 = vsel %vm695, 1, 0
      %v728 = vsel %vm696, 1, 0
      %v729 = vsel %vm697, 1, 0
      %v730 = vsel %vm698, 1, 0
      %v731 = vsel %vm699, 1, 0
      %v732 = vsel %vm700, 1, 0
      %v733 = vsel %vm701, 1, 0
      %v734 = vsel %vm702, 1, 0
      %v735 = vsel %vm703, 1, 0
      %v736 = vsel %vm704, 1, 0
      %v737 = vsel %vm705, 1, 0
      %v738 = vsel %vm706, 1, 0
      %v739 = vsel %vm707, 1, 0
      %v740 = vsel %vm708, 1, 0
      %v741 = vsel %vm709, 1, 0
      %v742 = vsel %vm710, 1, 0
      %v743 = vsel %vm711, 1, 0
      %v744 = vsel %vm712, 1, 0
      %v745 = vsel %vm713, 1, 0
      %v746 = vsel %vm714, 1, 0
      %v747 = vsel %vm715, 1, 0
      %v748 = vsel %vm716, 1, 0
      %v749 = vsel %vm717, 1, 0
      %v750 = vsel %vm718, 1, 0
      %v751 = vsel %vm719, 1, 0
      %v752 = vsel %vm720, 1, 0
      %v753 = vsel %vm721, 1, 0
      %v754 = vsel %vm722, 1, 0
      %v755 = vsel %vm723, 1, 0
      %v756 = vsel %vm724, 1, 0
      %v757 = vsel %vm725, 1, 0
      %v758 = vsel %vm726, 1, 0
      %v759 = vcvt.s32.f32 %v727
      %v760 = vcvt.s32.f32 %v728
      %v761 = vcvt.s32.f32 %v729
      %v762 = vcvt.s32.f32 %v730
      %v763 = vcvt.s32.f32 %v731
      %v764 = vcvt.s32.f32 %v732
      %v765 = vcvt.s32.f32 %v733
      %v766 = vcvt.s32.f32 %v734
      %v767 = vcvt.s32.f32 %v735
      %v768 = vcvt.s32.f32 %v736
      %v769 = vcvt.s32.f32 %v737
      %v770 = vcvt.s32.f32 %v738
      %v771 = vcvt.s32.f32 %v739
      %v772 = vcvt.s32.f32 %v740
      %v773 = vcvt.s32.f32 %v741
      %v774 = vcvt.s32.f32 %v742
      %v775 = vcvt.s32.f32 %v743
      %v776 = vcvt.s32.f32 %v744
      %v777 = vcvt.s32.f32 %v745
      %v778 = vcvt.s32.f32 %v746
      %v779 = vcvt.s32.f32 %v747
      %v780 = vcvt.s32.f32 %v748
      %v781 = vcvt.s32.f32 %v749
      %v782 = vcvt.s32.f32 %v750
      %v783 = vcvt.s32.f32 %v751
      %v784 = vcvt.s32.f32 %v752
      %v785 = vcvt.s32.f32 %v753
      %v786 = vcvt.s32.f32 %v754
      %v787 = vcvt.s32.f32 %v755
      %v788 = vcvt.s32.f32 %v756
      %v789 = vcvt.s32.f32 %v757
      %v790 = vcvt.s32.f32 %v758
      %v791 = vld [vmem:[%s215] sm:$0xff]
      %v792 = vld [vmem:[%s215 + $0x8] sm:$0xff]
      %v793 = vld [vmem:[%s215 + $0x10] sm:$0xff]
      %v794 = vld [vmem:[%s215 + $0x18] sm:$0xff]
      %v796 = vsel %vm502, %v388, 0
      %v799 = vsel %vm502, %v389, 0
      %v802 = vsel %vm502, %v390, 0
      %v805 = vsel %vm502, %v391, 0
      %v808 = vsel %vm502, %v392, 0
      %v811 = vsel %vm502, %v393, 0
      %v814 = vsel %vm502, %v394, 0
      %v817 = vsel %vm502, %v395, 0
      %v820 = vsel %vm502, %v396, 0
      %v823 = vsel %vm502, %v397, 0
      %v826 = vsel %vm502, %v398, 0
      %v829 = vsel %vm502, %v399, 0
      %v832 = vsel %vm502, %v400, 0
      %v835 = vsel %vm502, %v401, 0
      %v838 = vsel %vm502, %v402, 0
      %v841 = vsel %vm502, %v403, 0
      %v844 = vsel %vm502, %v404, 0
      %v847 = vsel %vm502, %v405, 0
      %v850 = vsel %vm502, %v406, 0
      %v853 = vsel %vm502, %v407, 0
      %v856 = vsel %vm502, %v408, 0
      %v859 = vsel %vm502, %v409, 0
      %v862 = vsel %vm502, %v410, 0
      %v865 = vsel %vm502, %v411, 0
      %v868 = vsel %vm502, %v412, 0
      %v871 = vsel %vm502, %v413, 0
      %v874 = vsel %vm502, %v414, 0
      %v877 = vsel %vm502, %v415, 0
      %v880 = vsel %vm502, %v416, 0
      %v883 = vsel %vm502, %v417, 0
      %v886 = vsel %vm502, %v418, 0
      %v889 = vsel %vm502, %v419, 0
      %891 = vmatprep.subr.mxu0 0.0
      %892 = vmatpush1.msra.mxu0 0.0
      %893 = vmatprep.subr.mxu0 0.0
      %894 = vmatpush1.msra.mxu0 0.0
      %895 = vmatprep.subr.mxu0 0.0
      %896 = vmatpush1.msra.mxu0 0.0
      %897 = vmatprep.subr.mxu0 0.0
      %898 = vmatpush1.msra.mxu0 0.0
      %899 = vmatprep.subr.mxu0 0.0
      %900 = vmatpush1.msra.mxu0 0.0
      %901 = vmatprep.subr.mxu0 0.0
      %902 = vmatpush1.msra.mxu0 0.0
      %903 = vmatprep.subr.mxu0 0.0
      %904 = vmatpush1.msra.mxu0 0.0
      %905 = vmatprep.subr.mxu0 0.0
      %906 = vmatpush1.msra.mxu0 0.0
      %907 = vmatprep.subr.mxu0 0.0
      %908 = vmatpush1.msra.mxu0 0.0
      %909 = vmatprep.subr.mxu0 0.0
      %910 = vmatpush1.msra.mxu0 0.0
      %911 = vmatprep.subr.mxu0 0.0
      %912 = vmatpush1.msra.mxu0 0.0
      %913 = vmatprep.subr.mxu0 0.0
      %914 = vmatpush1.msra.mxu0 0.0
      %915 = vmatprep.subr.mxu0 0.0
      %916 = vmatpush1.msra.mxu0 %v794
      %917 = vmatprep.subr.mxu0 0.0
      %918 = vmatpush1.msra.mxu0 %v793
      %919 = vmatprep.subr.mxu0 0.0
      %920 = vmatpush1.msra.mxu0 %v792
      %921 = vmatprep.subr.mxu0 0.0
      %922 = vmatpush1.msra.mxu0 %v791
      %923 = vmatprep.subr.mxu0 0.0
      %924 = vmatpush2.msra.mxu0 0.0
      %925 = vmatprep.subr.mxu0 0.0
      %926 = vmatpush2.msra.mxu0 0.0
      %927 = vmatprep.subr.mxu0 0.0
      %928 = vmatpush2.msra.mxu0 0.0
      %929 = vmatprep.subr.mxu0 0.0
      %930 = vmatpush2.msra.mxu0 0.0
      %931 = vmatprep.subr.mxu0 0.0
      %932 = vmatpush2.msra.mxu0 0.0
      %933 = vmatprep.subr.mxu0 0.0
      %934 = vmatpush2.msra.mxu0 0.0
      %935 = vmatprep.subr.mxu0 0.0
      %936 = vmatpush2.msra.mxu0 0.0
      %937 = vmatprep.subr.mxu0 0.0
      %938 = vmatpush2.msra.mxu0 0.0
      %939 = vmatprep.subr.mxu0 0.0
      %940 = vmatpush2.msra.mxu0 0.0
      %941 = vmatprep.subr.mxu0 0.0
      %942 = vmatpush2.msra.mxu0 0.0
      %943 = vmatprep.subr.mxu0 0.0
      %944 = vmatpush2.msra.mxu0 0.0
      %945 = vmatprep.subr.mxu0 0.0
      %946 = vmatpush2.msra.mxu0 0.0
      %947 = vmatprep.subr.mxu0 0.0
      %948 = vmatpush2.msra.mxu0 0.0
      %949 = vmatprep.subr.mxu0 0.0
      %950 = vmatpush2.msra.mxu0 0.0
      %951 = vmatprep.subr.mxu0 0.0
      %952 = vmatpush2.msra.mxu0 0.0
      %953 = vmatprep.subr.mxu0 0.0
      %954 = vmatpush2.msra.mxu0 0.0
      %955 = vmatprep.mubr.f32.mxu0 0.0
      %956 = vmatmul.mubr.f32.gmra.mxu0 %v796
      %v957 = vpop.f32.mrf.mxu0
      %v958 = vadd.f32 0.0, %v957
      %v959 = vpop.f32.mrf.mxu0
      %960 = vmatprep.mubr.f32.mxu0 0.0
      %961 = vmatmul.mubr.f32.gmra.mxu0 %v799
      %v962 = vpop.f32.mrf.mxu0
      %v963 = vadd.f32 0.0, %v962
      %v964 = vpop.f32.mrf.mxu0
      %965 = vmatprep.mubr.f32.mxu0 0.0
      %966 = vmatmul.mubr.f32.gmra.mxu0 %v802
      %v967 = vpop.f32.mrf.mxu0
      %v968 = vadd.f32 0.0, %v967
      %v969 = vpop.f32.mrf.mxu0
      %970 = vmatprep.mubr.f32.mxu0 0.0
      %971 = vmatmul.mubr.f32.gmra.mxu0 %v805
      %v972 = vpop.f32.mrf.mxu0
      %v973 = vadd.f32 0.0, %v972
      %v974 = vpop.f32.mrf.mxu0
      %975 = vmatprep.mubr.f32.mxu0 0.0
      %976 = vmatmul.mubr.f32.gmra.mxu0 %v808
      %v977 = vpop.f32.mrf.mxu0
      %v978 = vadd.f32 0.0, %v977
      %v979 = vpop.f32.mrf.mxu0
      %980 = vmatprep.mubr.f32.mxu0 0.0
      %981 = vmatmul.mubr.f32.gmra.mxu0 %v811
      %v982 = vpop.f32.mrf.mxu0
      %v983 = vadd.f32 0.0, %v982
      %v984 = vpop.f32.mrf.mxu0
      %985 = vmatprep.mubr.f32.mxu0 0.0
      %986 = vmatmul.mubr.f32.gmra.mxu0 %v814
      %v987 = vpop.f32.mrf.mxu0
      %v988 = vadd.f32 0.0, %v987
      %v989 = vpop.f32.mrf.mxu0
      %990 = vmatprep.mubr.f32.mxu0 0.0
      %991 = vmatmul.mubr.f32.gmra.mxu0 %v817
      %v992 = vpop.f32.mrf.mxu0
      %v993 = vadd.f32 0.0, %v992
      %v994 = vpop.f32.mrf.mxu0
      %995 = vmatprep.mubr.f32.mxu0 0.0
      %996 = vmatmul.mubr.f32.gmra.mxu0 %v820
      %v997 = vpop.f32.mrf.mxu0
      %v998 = vadd.f32 0.0, %v997
      %v999 = vpop.f32.mrf.mxu0
      %1000 = vmatprep.mubr.f32.mxu0 0.0
      %1001 = vmatmul.mubr.f32.gmra.mxu0 %v823
      %v1002 = vpop.f32.mrf.mxu0
      %v1003 = vadd.f32 0.0, %v1002
      %v1004 = vpop.f32.mrf.mxu0
      %1005 = vmatprep.mubr.f32.mxu0 0.0
      %1006 = vmatmul.mubr.f32.gmra.mxu0 %v826
      %v1007 = vpop.f32.mrf.mxu0
      %v1008 = vadd.f32 0.0, %v1007
      %v1009 = vpop.f32.mrf.mxu0
      %1010 = vmatprep.mubr.f32.mxu0 0.0
      %1011 = vmatmul.mubr.f32.gmra.mxu0 %v829
      %v1012 = vpop.f32.mrf.mxu0
      %v1013 = vadd.f32 0.0, %v1012
      %v1014 = vpop.f32.mrf.mxu0
      %1015 = vmatprep.mubr.f32.mxu0 0.0
      %1016 = vmatmul.mubr.f32.gmra.mxu0 %v832
      %v1017 = vpop.f32.mrf.mxu0
      %v1018 = vadd.f32 0.0, %v1017
      %v1019 = vpop.f32.mrf.mxu0
      %1020 = vmatprep.mubr.f32.mxu0 0.0
      %1021 = vmatmul.mubr.f32.gmra.mxu0 %v835
      %v1022 = vpop.f32.mrf.mxu0
      %v1023 = vadd.f32 0.0, %v1022
      %v1024 = vpop.f32.mrf.mxu0
      %1025 = vmatprep.mubr.f32.mxu0 0.0
      %1026 = vmatmul.mubr.f32.gmra.mxu0 %v838
      %v1027 = vpop.f32.mrf.mxu0
      %v1028 = vadd.f32 0.0, %v1027
      %v1029 = vpop.f32.mrf.mxu0
      %1030 = vmatprep.mubr.f32.mxu0 0.0
      %1031 = vmatmul.mubr.f32.gmra.mxu0 %v841
      %v1032 = vpop.f32.mrf.mxu0
      %v1033 = vadd.f32 0.0, %v1032
      %v1034 = vpop.f32.mrf.mxu0
      %1035 = vmatprep.mubr.f32.mxu0 0.0
      %1036 = vmatmul.mubr.f32.gmra.mxu0 %v844
      %v1037 = vpop.f32.mrf.mxu0
      %v1038 = vadd.f32 0.0, %v1037
      %v1039 = vpop.f32.mrf.mxu0
      %1040 = vmatprep.mubr.f32.mxu0 0.0
      %1041 = vmatmul.mubr.f32.gmra.mxu0 %v847
      %v1042 = vpop.f32.mrf.mxu0
      %v1043 = vadd.f32 0.0, %v1042
      %v1044 = vpop.f32.mrf.mxu0
      %1045 = vmatprep.mubr.f32.mxu0 0.0
      %1046 = vmatmul.mubr.f32.gmra.mxu0 %v850
      %v1047 = vpop.f32.mrf.mxu0
      %v1048 = vadd.f32 0.0, %v1047
      %v1049 = vpop.f32.mrf.mxu0
      %1050 = vmatprep.mubr.f32.mxu0 0.0
      %1051 = vmatmul.mubr.f32.gmra.mxu0 %v853
      %v1052 = vpop.f32.mrf.mxu0
      %v1053 = vadd.f32 0.0, %v1052
      %v1054 = vpop.f32.mrf.mxu0
      %1055 = vmatprep.mubr.f32.mxu0 0.0
      %1056 = vmatmul.mubr.f32.gmra.mxu0 %v856
      %v1057 = vpop.f32.mrf.mxu0
      %v1058 = vadd.f32 0.0, %v1057
      %v1059 = vpop.f32.mrf.mxu0
      %1060 = vmatprep.mubr.f32.mxu0 0.0
      %1061 = vmatmul.mubr.f32.gmra.mxu0 %v859
      %v1062 = vpop.f32.mrf.mxu0
      %v1063 = vadd.f32 0.0, %v1062
      %v1064 = vpop.f32.mrf.mxu0
      %1065 = vmatprep.mubr.f32.mxu0 0.0
      %1066 = vmatmul.mubr.f32.gmra.mxu0 %v862
      %v1067 = vpop.f32.mrf.mxu0
      %v1068 = vadd.f32 0.0, %v1067
      %v1069 = vpop.f32.mrf.mxu0
      %1070 = vmatprep.mubr.f32.mxu0 0.0
      %1071 = vmatmul.mubr.f32.gmra.mxu0 %v865
      %v1072 = vpop.f32.mrf.mxu0
      %v1073 = vadd.f32 0.0, %v1072
      %v1074 = vpop.f32.mrf.mxu0
      %1075 = vmatprep.mubr.f32.mxu0 0.0
      %1076 = vmatmul.mubr.f32.gmra.mxu0 %v868
      %v1077 = vpop.f32.mrf.mxu0
      %v1078 = vadd.f32 0.0, %v1077
      %v1079 = vpop.f32.mrf.mxu0
      %1080 = vmatprep.mubr.f32.mxu0 0.0
      %1081 = vmatmul.mubr.f32.gmra.mxu0 %v871
      %v1082 = vpop.f32.mrf.mxu0
      %v1083 = vadd.f32 0.0, %v1082
      %v1084 = vpop.f32.mrf.mxu0
      %1085 = vmatprep.mubr.f32.mxu0 0.0
      %1086 = vmatmul.mubr.f32.gmra.mxu0 %v874
      %v1087 = vpop.f32.mrf.mxu0
      %v1088 = vadd.f32 0.0, %v1087
      %v1089 = vpop.f32.mrf.mxu0
      %1090 = vmatprep.mubr.f32.mxu0 0.0
      %1091 = vmatmul.mubr.f32.gmra.mxu0 %v877
      %v1092 = vpop.f32.mrf.mxu0
      %v1093 = vadd.f32 0.0, %v1092
      %v1094 = vpop.f32.mrf.mxu0
      %1095 = vmatprep.mubr.f32.mxu0 0.0
      %1096 = vmatmul.mubr.f32.gmra.mxu0 %v880
      %v1097 = vpop.f32.mrf.mxu0
      %v1098 = vadd.f32 0.0, %v1097
      %v1099 = vpop.f32.mrf.mxu0
      %1100 = vmatprep.mubr.f32.mxu0 0.0
      %1101 = vmatmul.mubr.f32.gmra.mxu0 %v883
      %v1102 = vpop.f32.mrf.mxu0
      %v1103 = vadd.f32 0.0, %v1102
      %v1104 = vpop.f32.mrf.mxu0
      %1105 = vmatprep.mubr.f32.mxu0 0.0
      %1106 = vmatmul.mubr.f32.gmra.mxu0 %v886
      %v1107 = vpop.f32.mrf.mxu0
      %v1108 = vadd.f32 0.0, %v1107
      %v1109 = vpop.f32.mrf.mxu0
      %1110 = vmatprep.mubr.f32.mxu0 0.0
      %1111 = vmatmul.mubr.f32.gmra.mxu0 %v889
      %v1112 = vpop.f32.mrf.mxu0
      %v1113 = vadd.f32 0.0, %v1112
      %v1114 = vpop.f32.mrf.mxu0
      %1115 = vdwg.mxu0
      %v1116 = vld [vmem:[%s209] sm:$0xff]
      %v1117 = vld [vmem:[%s209 + $0x8] sm:$0xff]
      %v1118 = vld [vmem:[%s209 + $0x10] sm:$0xff]
      %v1119 = vld [vmem:[%s209 + $0x18] sm:$0xff]
      %v1120 = vld [vmem:[%s209 + $0x20] sm:$0xff]
      %v1121 = vld [vmem:[%s209 + $0x28] sm:$0xff]
      %v1122 = vld [vmem:[%s209 + $0x30] sm:$0xff]
      %v1123 = vld [vmem:[%s209 + $0x38] sm:$0xff]
      %v1124 = vld [vmem:[%s209 + $0x40] sm:$0xff]
      %v1125 = vld [vmem:[%s209 + $0x48] sm:$0xff]
      %v1126 = vld [vmem:[%s209 + $0x50] sm:$0xff]
      %v1127 = vld [vmem:[%s209 + $0x58] sm:$0xff]
      %v1128 = vld [vmem:[%s209 + $0x60] sm:$0xff]
      %v1129 = vld [vmem:[%s209 + $0x68] sm:$0xff]
      %v1130 = vld [vmem:[%s209 + $0x70] sm:$0xff]
      %v1131 = vld [vmem:[%s209 + $0x78] sm:$0xff]
      %v1132 = vld [vmem:[%s209 + $0x80] sm:$0xff]
      %v1133 = vld [vmem:[%s209 + $0x88] sm:$0xff]
      %v1134 = vld [vmem:[%s209 + $0x90] sm:$0xff]
      %v1135 = vld [vmem:[%s209 + $0x98] sm:$0xff]
      %v1136 = vld [vmem:[%s209 + $0xa0] sm:$0xff]
      %v1137 = vld [vmem:[%s209 + $0xa8] sm:$0xff]
      %v1138 = vld [vmem:[%s209 + $0xb0] sm:$0xff]
      %v1139 = vld [vmem:[%s209 + $0xb8] sm:$0xff]
      %v1140 = vld [vmem:[%s209 + $0xc0] sm:$0xff]
      %v1141 = vld [vmem:[%s209 + $0xc8] sm:$0xff]
      %v1142 = vld [vmem:[%s209 + $0xd0] sm:$0xff]
      %v1143 = vld [vmem:[%s209 + $0xd8] sm:$0xff]
      %v1144 = vld [vmem:[%s209 + $0xe0] sm:$0xff]
      %v1145 = vld [vmem:[%s209 + $0xe8] sm:$0xff]
      %v1146 = vld [vmem:[%s209 + $0xf0] sm:$0xff]
      %v1147 = vld [vmem:[%s209 + $0xf8] sm:$0xff]
      %v1148 = vld [vmem:[%s2] sm:$0xff]
      %v1149 = vld [vmem:[%s2 + $0x8] sm:$0xff]
      %v1150 = vld [vmem:[%s2 + $0x10] sm:$0xff]
      %v1151 = vld [vmem:[%s2 + $0x18] sm:$0xff]
      %v1153 = vsel %vm502, %v1116, 0
      %v1156 = vsel %vm502, %v1117, 0
      %v1159 = vsel %vm502, %v1118, 0
      %v1162 = vsel %vm502, %v1119, 0
      %v1165 = vsel %vm502, %v1120, 0
      %v1168 = vsel %vm502, %v1121, 0
      %v1171 = vsel %vm502, %v1122, 0
      %v1174 = vsel %vm502, %v1123, 0
      %v1177 = vsel %vm502, %v1124, 0
      %v1180 = vsel %vm502, %v1125, 0
      %v1183 = vsel %vm502, %v1126, 0
      %v1186 = vsel %vm502, %v1127, 0
      %v1189 = vsel %vm502, %v1128, 0
      %v1192 = vsel %vm502, %v1129, 0
      %v1195 = vsel %vm502, %v1130, 0
      %v1198 = vsel %vm502, %v1131, 0
      %v1201 = vsel %vm502, %v1132, 0
      %v1204 = vsel %vm502, %v1133, 0
      %v1207 = vsel %vm502, %v1134, 0
      %v1210 = vsel %vm502, %v1135, 0
      %v1213 = vsel %vm502, %v1136, 0
      %v1216 = vsel %vm502, %v1137, 0
      %v1219 = vsel %vm502, %v1138, 0
      %v1222 = vsel %vm502, %v1139, 0
      %v1225 = vsel %vm502, %v1140, 0
      %v1228 = vsel %vm502, %v1141, 0
      %v1231 = vsel %vm502, %v1142, 0
      %v1234 = vsel %vm502, %v1143, 0
      %v1237 = vsel %vm502, %v1144, 0
      %v1240 = vsel %vm502, %v1145, 0
      %v1243 = vsel %vm502, %v1146, 0
      %v1246 = vsel %vm502, %v1147, 0
      %1248 = vmatprep.subr.mxu0 0.0
      %1249 = vmatpush1.msra.mxu0 0.0
      %1250 = vmatprep.subr.mxu0 0.0
      %1251 = vmatpush1.msra.mxu0 0.0
      %1252 = vmatprep.subr.mxu0 0.0
      %1253 = vmatpush1.msra.mxu0 0.0
      %1254 = vmatprep.subr.mxu0 0.0
      %1255 = vmatpush1.msra.mxu0 0.0
      %1256 = vmatprep.subr.mxu0 0.0
      %1257 = vmatpush1.msra.mxu0 0.0
      %1258 = vmatprep.subr.mxu0 0.0
      %1259 = vmatpush1.msra.mxu0 0.0
      %1260 = vmatprep.subr.mxu0 0.0
      %1261 = vmatpush1.msra.mxu0 0.0
      %1262 = vmatprep.subr.mxu0 0.0
      %1263 = vmatpush1.msra.mxu0 0.0
      %1264 = vmatprep.subr.mxu0 0.0
      %1265 = vmatpush1.msra.mxu0 0.0
      %1266 = vmatprep.subr.mxu0 0.0
      %1267 = vmatpush1.msra.mxu0 0.0
      %1268 = vmatprep.subr.mxu0 0.0
      %1269 = vmatpush1.msra.mxu0 0.0
      %1270 = vmatprep.subr.mxu0 0.0
      %1271 = vmatpush1.msra.mxu0 0.0
      %1272 = vmatprep.subr.mxu0 0.0
      %1273 = vmatpush1.msra.mxu0 %v1151
      %1274 = vmatprep.subr.mxu0 0.0
      %1275 = vmatpush1.msra.mxu0 %v1150
      %1276 = vmatprep.subr.mxu0 0.0
      %1277 = vmatpush1.msra.mxu0 %v1149
      %1278 = vmatprep.subr.mxu0 0.0
      %1279 = vmatpush1.msra.mxu0 %v1148
      %1280 = vmatprep.subr.mxu0 0.0
      %1281 = vmatpush2.msra.mxu0 0.0
      %1282 = vmatprep.subr.mxu0 0.0
      %1283 = vmatpush2.msra.mxu0 0.0
      %1284 = vmatprep.subr.mxu0 0.0
      %1285 = vmatpush2.msra.mxu0 0.0
      %1286 = vmatprep.subr.mxu0 0.0
      %1287 = vmatpush2.msra.mxu0 0.0
      %1288 = vmatprep.subr.mxu0 0.0
      %1289 = vmatpush2.msra.mxu0 0.0
      %1290 = vmatprep.subr.mxu0 0.0
      %1291 = vmatpush2.msra.mxu0 0.0
      %1292 = vmatprep.subr.mxu0 0.0
      %1293 = vmatpush2.msra.mxu0 0.0
      %1294 = vmatprep.subr.mxu0 0.0
      %1295 = vmatpush2.msra.mxu0 0.0
      %1296 = vmatprep.subr.mxu0 0.0
      %1297 = vmatpush2.msra.mxu0 0.0
      %1298 = vmatprep.subr.mxu0 0.0
      %1299 = vmatpush2.msra.mxu0 0.0
      %1300 = vmatprep.subr.mxu0 0.0
      %1301 = vmatpush2.msra.mxu0 0.0
      %1302 = vmatprep.subr.mxu0 0.0
      %1303 = vmatpush2.msra.mxu0 0.0
      %1304 = vmatprep.subr.mxu0 0.0
      %1305 = vmatpush2.msra.mxu0 0.0
      %1306 = vmatprep.subr.mxu0 0.0
      %1307 = vmatpush2.msra.mxu0 0.0
      %1308 = vmatprep.subr.mxu0 0.0
      %1309 = vmatpush2.msra.mxu0 0.0
      %1310 = vmatprep.subr.mxu0 0.0
      %1311 = vmatpush2.msra.mxu0 0.0
      %1312 = vmatprep.mubr.f32.mxu0 0.0
      %1313 = vmatmul.mubr.f32.gmra.mxu0 %v1153
      %v1314 = vpop.f32.mrf.mxu0
      %v1315 = vadd.f32 %v958, %v1314
      %v1316 = vpop.f32.mrf.mxu0
      %1317 = vmatprep.mubr.f32.mxu0 0.0
      %1318 = vmatmul.mubr.f32.gmra.mxu0 %v1156
      %v1319 = vpop.f32.mrf.mxu0
      %v1320 = vadd.f32 %v963, %v1319
      %v1321 = vpop.f32.mrf.mxu0
      %1322 = vmatprep.mubr.f32.mxu0 0.0
      %1323 = vmatmul.mubr.f32.gmra.mxu0 %v1159
      %v1324 = vpop.f32.mrf.mxu0
      %v1325 = vadd.f32 %v968, %v1324
      %v1326 = vpop.f32.mrf.mxu0
      %1327 = vmatprep.mubr.f32.mxu0 0.0
      %1328 = vmatmul.mubr.f32.gmra.mxu0 %v1162
      %v1329 = vpop.f32.mrf.mxu0
      %v1330 = vadd.f32 %v973, %v1329
      %v1331 = vpop.f32.mrf.mxu0
      %1332 = vmatprep.mubr.f32.mxu0 0.0
      %1333 = vmatmul.mubr.f32.gmra.mxu0 %v1165
      %v1334 = vpop.f32.mrf.mxu0
      %v1335 = vadd.f32 %v978, %v1334
      %v1336 = vpop.f32.mrf.mxu0
      %1337 = vmatprep.mubr.f32.mxu0 0.0
      %1338 = vmatmul.mubr.f32.gmra.mxu0 %v1168
      %v1339 = vpop.f32.mrf.mxu0
      %v1340 = vadd.f32 %v983, %v1339
      %v1341 = vpop.f32.mrf.mxu0
      %1342 = vmatprep.mubr.f32.mxu0 0.0
      %1343 = vmatmul.mubr.f32.gmra.mxu0 %v1171
      %v1344 = vpop.f32.mrf.mxu0
      %v1345 = vadd.f32 %v988, %v1344
      %v1346 = vpop.f32.mrf.mxu0
      %1347 = vmatprep.mubr.f32.mxu0 0.0
      %1348 = vmatmul.mubr.f32.gmra.mxu0 %v1174
      %v1349 = vpop.f32.mrf.mxu0
      %v1350 = vadd.f32 %v993, %v1349
      %v1351 = vpop.f32.mrf.mxu0
      %1352 = vmatprep.mubr.f32.mxu0 0.0
      %1353 = vmatmul.mubr.f32.gmra.mxu0 %v1177
      %v1354 = vpop.f32.mrf.mxu0
      %v1355 = vadd.f32 %v998, %v1354
      %v1356 = vpop.f32.mrf.mxu0
      %1357 = vmatprep.mubr.f32.mxu0 0.0
      %1358 = vmatmul.mubr.f32.gmra.mxu0 %v1180
      %v1359 = vpop.f32.mrf.mxu0
      %v1360 = vadd.f32 %v1003, %v1359
      %v1361 = vpop.f32.mrf.mxu0
      %1362 = vmatprep.mubr.f32.mxu0 0.0
      %1363 = vmatmul.mubr.f32.gmra.mxu0 %v1183
      %v1364 = vpop.f32.mrf.mxu0
      %v1365 = vadd.f32 %v1008, %v1364
      %v1366 = vpop.f32.mrf.mxu0
      %1367 = vmatprep.mubr.f32.mxu0 0.0
      %1368 = vmatmul.mubr.f32.gmra.mxu0 %v1186
      %v1369 = vpop.f32.mrf.mxu0
      %v1370 = vadd.f32 %v1013, %v1369
      %v1371 = vpop.f32.mrf.mxu0
      %1372 = vmatprep.mubr.f32.mxu0 0.0
      %1373 = vmatmul.mubr.f32.gmra.mxu0 %v1189
      %v1374 = vpop.f32.mrf.mxu0
      %v1375 = vadd.f32 %v1018, %v1374
      %v1376 = vpop.f32.mrf.mxu0
      %1377 = vmatprep.mubr.f32.mxu0 0.0
      %1378 = vmatmul.mubr.f32.gmra.mxu0 %v1192
      %v1379 = vpop.f32.mrf.mxu0
      %v1380 = vadd.f32 %v1023, %v1379
      %v1381 = vpop.f32.mrf.mxu0
      %1382 = vmatprep.mubr.f32.mxu0 0.0
      %1383 = vmatmul.mubr.f32.gmra.mxu0 %v1195
      %v1384 = vpop.f32.mrf.mxu0
      %v1385 = vadd.f32 %v1028, %v1384
      %v1386 = vpop.f32.mrf.mxu0
      %1387 = vmatprep.mubr.f32.mxu0 0.0
      %1388 = vmatmul.mubr.f32.gmra.mxu0 %v1198
      %v1389 = vpop.f32.mrf.mxu0
      %v1390 = vadd.f32 %v1033, %v1389
      %v1391 = vpop.f32.mrf.mxu0
      %1392 = vmatprep.mubr.f32.mxu0 0.0
      %1393 = vmatmul.mubr.f32.gmra.mxu0 %v1201
      %v1394 = vpop.f32.mrf.mxu0
      %v1395 = vadd.f32 %v1038, %v1394
      %v1396 = vpop.f32.mrf.mxu0
      %1397 = vmatprep.mubr.f32.mxu0 0.0
      %1398 = vmatmul.mubr.f32.gmra.mxu0 %v1204
      %v1399 = vpop.f32.mrf.mxu0
      %v1400 = vadd.f32 %v1043, %v1399
      %v1401 = vpop.f32.mrf.mxu0
      %1402 = vmatprep.mubr.f32.mxu0 0.0
      %1403 = vmatmul.mubr.f32.gmra.mxu0 %v1207
      %v1404 = vpop.f32.mrf.mxu0
      %v1405 = vadd.f32 %v1048, %v1404
      %v1406 = vpop.f32.mrf.mxu0
      %1407 = vmatprep.mubr.f32.mxu0 0.0
      %1408 = vmatmul.mubr.f32.gmra.mxu0 %v1210
      %v1409 = vpop.f32.mrf.mxu0
      %v1410 = vadd.f32 %v1053, %v1409
      %v1411 = vpop.f32.mrf.mxu0
      %1412 = vmatprep.mubr.f32.mxu0 0.0
      %1413 = vmatmul.mubr.f32.gmra.mxu0 %v1213
      %v1414 = vpop.f32.mrf.mxu0
      %v1415 = vadd.f32 %v1058, %v1414
      %v1416 = vpop.f32.mrf.mxu0
      %1417 = vmatprep.mubr.f32.mxu0 0.0
      %1418 = vmatmul.mubr.f32.gmra.mxu0 %v1216
      %v1419 = vpop.f32.mrf.mxu0
      %v1420 = vadd.f32 %v1063, %v1419
      %v1421 = vpop.f32.mrf.mxu0
      %1422 = vmatprep.mubr.f32.mxu0 0.0
      %1423 = vmatmul.mubr.f32.gmra.mxu0 %v1219
      %v1424 = vpop.f32.mrf.mxu0
      %v1425 = vadd.f32 %v1068, %v1424
      %v1426 = vpop.f32.mrf.mxu0
      %1427 = vmatprep.mubr.f32.mxu0 0.0
      %1428 = vmatmul.mubr.f32.gmra.mxu0 %v1222
      %v1429 = vpop.f32.mrf.mxu0
      %v1430 = vadd.f32 %v1073, %v1429
      %v1431 = vpop.f32.mrf.mxu0
      %1432 = vmatprep.mubr.f32.mxu0 0.0
      %1433 = vmatmul.mubr.f32.gmra.mxu0 %v1225
      %v1434 = vpop.f32.mrf.mxu0
      %v1435 = vadd.f32 %v1078, %v1434
      %v1436 = vpop.f32.mrf.mxu0
      %1437 = vmatprep.mubr.f32.mxu0 0.0
      %1438 = vmatmul.mubr.f32.gmra.mxu0 %v1228
      %v1439 = vpop.f32.mrf.mxu0
      %v1440 = vadd.f32 %v1083, %v1439
      %v1441 = vpop.f32.mrf.mxu0
      %1442 = vmatprep.mubr.f32.mxu0 0.0
      %1443 = vmatmul.mubr.f32.gmra.mxu0 %v1231
      %v1444 = vpop.f32.mrf.mxu0
      %v1445 = vadd.f32 %v1088, %v1444
      %v1446 = vpop.f32.mrf.mxu0
      %1447 = vmatprep.mubr.f32.mxu0 0.0
      %1448 = vmatmul.mubr.f32.gmra.mxu0 %v1234
      %v1449 = vpop.f32.mrf.mxu0
      %v1450 = vadd.f32 %v1093, %v1449
      %v1451 = vpop.f32.mrf.mxu0
      %1452 = vmatprep.mubr.f32.mxu0 0.0
      %1453 = vmatmul.mubr.f32.gmra.mxu0 %v1237
      %v1454 = vpop.f32.mrf.mxu0
      %v1455 = vadd.f32 %v1098, %v1454
      %v1456 = vpop.f32.mrf.mxu0
      %1457 = vmatprep.mubr.f32.mxu0 0.0
      %1458 = vmatmul.mubr.f32.gmra.mxu0 %v1240
      %v1459 = vpop.f32.mrf.mxu0
      %v1460 = vadd.f32 %v1103, %v1459
      %v1461 = vpop.f32.mrf.mxu0
      %1462 = vmatprep.mubr.f32.mxu0 0.0
      %1463 = vmatmul.mubr.f32.gmra.mxu0 %v1243
      %v1464 = vpop.f32.mrf.mxu0
      %v1465 = vadd.f32 %v1108, %v1464
      %v1466 = vpop.f32.mrf.mxu0
      %1467 = vmatprep.mubr.f32.mxu0 0.0
      %1468 = vmatmul.mubr.f32.gmra.mxu0 %v1246
      %v1469 = vpop.f32.mrf.mxu0
      %v1470 = vadd.f32 %v1113, %v1469
      %v1471 = vpop.f32.mrf.mxu0
      %1472 = vdwg.mxu0
      %v1473 = vtanh.pop %v1315
      %v1474 = vtanh.pop %v1320
      %v1475 = vtanh.pop %v1325
      %v1476 = vtanh.pop %v1330
      %v1477 = vtanh.pop %v1335
      %v1478 = vtanh.pop %v1340
      %v1479 = vtanh.pop %v1345
      %v1480 = vtanh.pop %v1350
      %v1481 = vtanh.pop %v1355
      %v1482 = vtanh.pop %v1360
      %v1483 = vtanh.pop %v1365
      %v1484 = vtanh.pop %v1370
      %v1485 = vtanh.pop %v1375
      %v1486 = vtanh.pop %v1380
      %v1487 = vtanh.pop %v1385
      %v1488 = vtanh.pop %v1390
      %v1489 = vtanh.pop %v1395
      %v1490 = vtanh.pop %v1400
      %v1491 = vtanh.pop %v1405
      %v1492 = vtanh.pop %v1410
      %v1493 = vtanh.pop %v1415
      %v1494 = vtanh.pop %v1420
      %v1495 = vtanh.pop %v1425
      %v1496 = vtanh.pop %v1430
      %v1497 = vtanh.pop %v1435
      %v1498 = vtanh.pop %v1440
      %v1499 = vtanh.pop %v1445
      %v1500 = vtanh.pop %v1450
      %v1501 = vtanh.pop %v1455
      %v1502 = vtanh.pop %v1460
      %v1503 = vtanh.pop %v1465
      %v1504 = vtanh.pop %v1470
      %v1505 = vld [vmem:[%s3] sm:$0xff]
      %v1506 = vld [vmem:[%s3 + $0x8] sm:$0xff]
      %v1507 = vld [vmem:[%s3 + $0x10] sm:$0xff]
      %v1508 = vld [vmem:[%s3 + $0x18] sm:$0xff]
      %v1510 = vsel %vm502, %v1473, 0
      %v1513 = vsel %vm502, %v1474, 0
      %v1516 = vsel %vm502, %v1475, 0
      %v1519 = vsel %vm502, %v1476, 0
      %v1522 = vsel %vm502, %v1477, 0
      %v1525 = vsel %vm502, %v1478, 0
      %v1528 = vsel %vm502, %v1479, 0
      %v1531 = vsel %vm502, %v1480, 0
      %v1534 = vsel %vm502, %v1481, 0
      %v1537 = vsel %vm502, %v1482, 0
      %v1540 = vsel %vm502, %v1483, 0
      %v1543 = vsel %vm502, %v1484, 0
      %v1546 = vsel %vm502, %v1485, 0
      %v1549 = vsel %vm502, %v1486, 0
      %v1552 = vsel %vm502, %v1487, 0
      %v1555 = vsel %vm502, %v1488, 0
      %v1558 = vsel %vm502, %v1489, 0
      %v1561 = vsel %vm502, %v1490, 0
      %v1564 = vsel %vm502, %v1491, 0
      %v1567 = vsel %vm502, %v1492, 0
      %v1570 = vsel %vm502, %v1493, 0
      %v1573 = vsel %vm502, %v1494, 0
      %v1576 = vsel %vm502, %v1495, 0
      %v1579 = vsel %vm502, %v1496, 0
      %v1582 = vsel %vm502, %v1497, 0
      %v1585 = vsel %vm502, %v1498, 0
      %v1588 = vsel %vm502, %v1499, 0
      %v1591 = vsel %vm502, %v1500, 0
      %v1594 = vsel %vm502, %v1501, 0
      %v1597 = vsel %vm502, %v1502, 0
      %v1600 = vsel %vm502, %v1503, 0
      %v1603 = vsel %vm502, %v1504, 0
      %1605 = vmatprep.subr.mxu0 0.0
      %1606 = vmatpush1.msra.mxu0 0.0
      %1607 = vmatprep.subr.mxu0 0.0
      %1608 = vmatpush1.msra.mxu0 0.0
      %1609 = vmatprep.subr.mxu0 0.0
      %1610 = vmatpush1.msra.mxu0 0.0
      %1611 = vmatprep.subr.mxu0 0.0
      %1612 = vmatpush1.msra.mxu0 0.0
      %1613 = vmatprep.subr.mxu0 0.0
      %1614 = vmatpush1.msra.mxu0 0.0
      %1615 = vmatprep.subr.mxu0 0.0
      %1616 = vmatpush1.msra.mxu0 0.0
      %1617 = vmatprep.subr.mxu0 0.0
      %1618 = vmatpush1.msra.mxu0 0.0
      %1619 = vmatprep.subr.mxu0 0.0
      %1620 = vmatpush1.msra.mxu0 0.0
      %1621 = vmatprep.subr.mxu0 0.0
      %1622 = vmatpush1.msra.mxu0 0.0
      %1623 = vmatprep.subr.mxu0 0.0
      %1624 = vmatpush1.msra.mxu0 0.0
      %1625 = vmatprep.subr.mxu0 0.0
      %1626 = vmatpush1.msra.mxu0 0.0
      %1627 = vmatprep.subr.mxu0 0.0
      %1628 = vmatpush1.msra.mxu0 0.0
      %1629 = vmatprep.subr.mxu0 0.0
      %1630 = vmatpush1.msra.mxu0 %v1508
      %1631 = vmatprep.subr.mxu0 0.0
      %1632 = vmatpush1.msra.mxu0 %v1507
      %1633 = vmatprep.subr.mxu0 0.0
      %1634 = vmatpush1.msra.mxu0 %v1506
      %1635 = vmatprep.subr.mxu0 0.0
      %1636 = vmatpush1.msra.mxu0 %v1505
      %1637 = vmatprep.subr.mxu0 0.0
      %1638 = vmatpush2.msra.mxu0 0.0
      %1639 = vmatprep.subr.mxu0 0.0
      %1640 = vmatpush2.msra.mxu0 0.0
      %1641 = vmatprep.subr.mxu0 0.0
      %1642 = vmatpush2.msra.mxu0 0.0
      %1643 = vmatprep.subr.mxu0 0.0
      %1644 = vmatpush2.msra.mxu0 0.0
      %1645 = vmatprep.subr.mxu0 0.0
      %1646 = vmatpush2.msra.mxu0 0.0
      %1647 = vmatprep.subr.mxu0 0.0
      %1648 = vmatpush2.msra.mxu0 0.0
      %1649 = vmatprep.subr.mxu0 0.0
      %1650 = vmatpush2.msra.mxu0 0.0
      %1651 = vmatprep.subr.mxu0 0.0
      %1652 = vmatpush2.msra.mxu0 0.0
      %1653 = vmatprep.subr.mxu0 0.0
      %1654 = vmatpush2.msra.mxu0 0.0
      %1655 = vmatprep.subr.mxu0 0.0
      %1656 = vmatpush2.msra.mxu0 0.0
      %1657 = vmatprep.subr.mxu0 0.0
      %1658 = vmatpush2.msra.mxu0 0.0
      %1659 = vmatprep.subr.mxu0 0.0
      %1660 = vmatpush2.msra.mxu0 0.0
      %1661 = vmatprep.subr.mxu0 0.0
      %1662 = vmatpush2.msra.mxu0 0.0
      %1663 = vmatprep.subr.mxu0 0.0
      %1664 = vmatpush2.msra.mxu0 0.0
      %1665 = vmatprep.subr.mxu0 0.0
      %1666 = vmatpush2.msra.mxu0 0.0
      %1667 = vmatprep.subr.mxu0 0.0
      %1668 = vmatpush2.msra.mxu0 0.0
      %1669 = vmatprep.mubr.f32.mxu0 0.0
      %1670 = vmatmul.mubr.f32.gmra.mxu0 %v1510
      %v1671 = vpop.f32.mrf.mxu0
      %v1672 = vadd.f32 0.0, %v1671
      %v1673 = vpop.f32.mrf.mxu0
      %1674 = vmatprep.mubr.f32.mxu0 0.0
      %1675 = vmatmul.mubr.f32.gmra.mxu0 %v1513
      %v1676 = vpop.f32.mrf.mxu0
      %v1677 = vadd.f32 0.0, %v1676
      %v1678 = vpop.f32.mrf.mxu0
      %1679 = vmatprep.mubr.f32.mxu0 0.0
      %1680 = vmatmul.mubr.f32.gmra.mxu0 %v1516
      %v1681 = vpop.f32.mrf.mxu0
      %v1682 = vadd.f32 0.0, %v1681
      %v1683 = vpop.f32.mrf.mxu0
      %1684 = vmatprep.mubr.f32.mxu0 0.0
      %1685 = vmatmul.mubr.f32.gmra.mxu0 %v1519
      %v1686 = vpop.f32.mrf.mxu0
      %v1687 = vadd.f32 0.0, %v1686
      %v1688 = vpop.f32.mrf.mxu0
      %1689 = vmatprep.mubr.f32.mxu0 0.0
      %1690 = vmatmul.mubr.f32.gmra.mxu0 %v1522
      %v1691 = vpop.f32.mrf.mxu0
      %v1692 = vadd.f32 0.0, %v1691
      %v1693 = vpop.f32.mrf.mxu0
      %1694 = vmatprep.mubr.f32.mxu0 0.0
      %1695 = vmatmul.mubr.f32.gmra.mxu0 %v1525
      %v1696 = vpop.f32.mrf.mxu0
      %v1697 = vadd.f32 0.0, %v1696
      %v1698 = vpop.f32.mrf.mxu0
      %1699 = vmatprep.mubr.f32.mxu0 0.0
      %1700 = vmatmul.mubr.f32.gmra.mxu0 %v1528
      %v1701 = vpop.f32.mrf.mxu0
      %v1702 = vadd.f32 0.0, %v1701
      %v1703 = vpop.f32.mrf.mxu0
      %1704 = vmatprep.mubr.f32.mxu0 0.0
      %1705 = vmatmul.mubr.f32.gmra.mxu0 %v1531
      %v1706 = vpop.f32.mrf.mxu0
      %v1707 = vadd.f32 0.0, %v1706
      %v1708 = vpop.f32.mrf.mxu0
      %1709 = vmatprep.mubr.f32.mxu0 0.0
      %1710 = vmatmul.mubr.f32.gmra.mxu0 %v1534
      %v1711 = vpop.f32.mrf.mxu0
      %v1712 = vadd.f32 0.0, %v1711
      %v1713 = vpop.f32.mrf.mxu0
      %1714 = vmatprep.mubr.f32.mxu0 0.0
      %1715 = vmatmul.mubr.f32.gmra.mxu0 %v1537
      %v1716 = vpop.f32.mrf.mxu0
      %v1717 = vadd.f32 0.0, %v1716
      %v1718 = vpop.f32.mrf.mxu0
      %1719 = vmatprep.mubr.f32.mxu0 0.0
      %1720 = vmatmul.mubr.f32.gmra.mxu0 %v1540
      %v1721 = vpop.f32.mrf.mxu0
      %v1722 = vadd.f32 0.0, %v1721
      %v1723 = vpop.f32.mrf.mxu0
      %1724 = vmatprep.mubr.f32.mxu0 0.0
      %1725 = vmatmul.mubr.f32.gmra.mxu0 %v1543
      %v1726 = vpop.f32.mrf.mxu0
      %v1727 = vadd.f32 0.0, %v1726
      %v1728 = vpop.f32.mrf.mxu0
      %1729 = vmatprep.mubr.f32.mxu0 0.0
      %1730 = vmatmul.mubr.f32.gmra.mxu0 %v1546
      %v1731 = vpop.f32.mrf.mxu0
      %v1732 = vadd.f32 0.0, %v1731
      %v1733 = vpop.f32.mrf.mxu0
      %1734 = vmatprep.mubr.f32.mxu0 0.0
      %1735 = vmatmul.mubr.f32.gmra.mxu0 %v1549
      %v1736 = vpop.f32.mrf.mxu0
      %v1737 = vadd.f32 0.0, %v1736
      %v1738 = vpop.f32.mrf.mxu0
      %1739 = vmatprep.mubr.f32.mxu0 0.0
      %1740 = vmatmul.mubr.f32.gmra.mxu0 %v1552
      %v1741 = vpop.f32.mrf.mxu0
      %v1742 = vadd.f32 0.0, %v1741
      %v1743 = vpop.f32.mrf.mxu0
      %1744 = vmatprep.mubr.f32.mxu0 0.0
      %1745 = vmatmul.mubr.f32.gmra.mxu0 %v1555
      %v1746 = vpop.f32.mrf.mxu0
      %v1747 = vadd.f32 0.0, %v1746
      %v1748 = vpop.f32.mrf.mxu0
      %1749 = vmatprep.mubr.f32.mxu0 0.0
      %1750 = vmatmul.mubr.f32.gmra.mxu0 %v1558
      %v1751 = vpop.f32.mrf.mxu0
      %v1752 = vadd.f32 0.0, %v1751
      %v1753 = vpop.f32.mrf.mxu0
      %1754 = vmatprep.mubr.f32.mxu0 0.0
      %1755 = vmatmul.mubr.f32.gmra.mxu0 %v1561
      %v1756 = vpop.f32.mrf.mxu0
      %v1757 = vadd.f32 0.0, %v1756
      %v1758 = vpop.f32.mrf.mxu0
      %1759 = vmatprep.mubr.f32.mxu0 0.0
      %1760 = vmatmul.mubr.f32.gmra.mxu0 %v1564
      %v1761 = vpop.f32.mrf.mxu0
      %v1762 = vadd.f32 0.0, %v1761
      %v1763 = vpop.f32.mrf.mxu0
      %1764 = vmatprep.mubr.f32.mxu0 0.0
      %1765 = vmatmul.mubr.f32.gmra.mxu0 %v1567
      %v1766 = vpop.f32.mrf.mxu0
      %v1767 = vadd.f32 0.0, %v1766
      %v1768 = vpop.f32.mrf.mxu0
      %1769 = vmatprep.mubr.f32.mxu0 0.0
      %1770 = vmatmul.mubr.f32.gmra.mxu0 %v1570
      %v1771 = vpop.f32.mrf.mxu0
      %v1772 = vadd.f32 0.0, %v1771
      %v1773 = vpop.f32.mrf.mxu0
      %1774 = vmatprep.mubr.f32.mxu0 0.0
      %1775 = vmatmul.mubr.f32.gmra.mxu0 %v1573
      %v1776 = vpop.f32.mrf.mxu0
      %v1777 = vadd.f32 0.0, %v1776
      %v1778 = vpop.f32.mrf.mxu0
      %1779 = vmatprep.mubr.f32.mxu0 0.0
      %1780 = vmatmul.mubr.f32.gmra.mxu0 %v1576
      %v1781 = vpop.f32.mrf.mxu0
      %v1782 = vadd.f32 0.0, %v1781
      %v1783 = vpop.f32.mrf.mxu0
      %1784 = vmatprep.mubr.f32.mxu0 0.0
      %1785 = vmatmul.mubr.f32.gmra.mxu0 %v1579
      %v1786 = vpop.f32.mrf.mxu0
      %v1787 = vadd.f32 0.0, %v1786
      %v1788 = vpop.f32.mrf.mxu0
      %1789 = vmatprep.mubr.f32.mxu0 0.0
      %1790 = vmatmul.mubr.f32.gmra.mxu0 %v1582
      %v1791 = vpop.f32.mrf.mxu0
      %v1792 = vadd.f32 0.0, %v1791
      %v1793 = vpop.f32.mrf.mxu0
      %1794 = vmatprep.mubr.f32.mxu0 0.0
      %1795 = vmatmul.mubr.f32.gmra.mxu0 %v1585
      %v1796 = vpop.f32.mrf.mxu0
      %v1797 = vadd.f32 0.0, %v1796
      %v1798 = vpop.f32.mrf.mxu0
      %1799 = vmatprep.mubr.f32.mxu0 0.0
      %1800 = vmatmul.mubr.f32.gmra.mxu0 %v1588
      %v1801 = vpop.f32.mrf.mxu0
      %v1802 = vadd.f32 0.0, %v1801
      %v1803 = vpop.f32.mrf.mxu0
      %1804 = vmatprep.mubr.f32.mxu0 0.0
      %1805 = vmatmul.mubr.f32.gmra.mxu0 %v1591
      %v1806 = vpop.f32.mrf.mxu0
      %v1807 = vadd.f32 0.0, %v1806
      %v1808 = vpop.f32.mrf.mxu0
      %1809 = vmatprep.mubr.f32.mxu0 0.0
      %1810 = vmatmul.mubr.f32.gmra.mxu0 %v1594
      %v1811 = vpop.f32.mrf.mxu0
      %v1812 = vadd.f32 0.0, %v1811
      %v1813 = vpop.f32.mrf.mxu0
      %1814 = vmatprep.mubr.f32.mxu0 0.0
      %1815 = vmatmul.mubr.f32.gmra.mxu0 %v1597
      %v1816 = vpop.f32.mrf.mxu0
      %v1817 = vadd.f32 0.0, %v1816
      %v1818 = vpop.f32.mrf.mxu0
      %1819 = vmatprep.mubr.f32.mxu0 0.0
      %1820 = vmatmul.mubr.f32.gmra.mxu0 %v1600
      %v1821 = vpop.f32.mrf.mxu0
      %v1822 = vadd.f32 0.0, %v1821
      %v1823 = vpop.f32.mrf.mxu0
      %1824 = vmatprep.mubr.f32.mxu0 0.0
      %1825 = vmatmul.mubr.f32.gmra.mxu0 %v1603
      %v1826 = vpop.f32.mrf.mxu0
      %v1827 = vadd.f32 0.0, %v1826
      %v1828 = vpop.f32.mrf.mxu0
      %1829 = vdwg.mxu0
      %1831 = vset.pattern.permute.xlu0 0
      %1832 = vperm.xlu0 %1831, %v1672
      %v1833 = vpop.permute.xlu0 %1832
      %1836 = vset.pattern.permute.xlu0 0
      %1837 = vperm.xlu0 %1836, %v1677
      %v1838 = vpop.permute.xlu0 %1837
      %1841 = vset.pattern.permute.xlu0 0
      %1842 = vperm.xlu0 %1841, %v1682
      %v1843 = vpop.permute.xlu0 %1842
      %1846 = vset.pattern.permute.xlu0 0
      %1847 = vperm.xlu0 %1846, %v1687
      %v1848 = vpop.permute.xlu0 %1847
      %1851 = vset.pattern.permute.xlu0 0
      %1852 = vperm.xlu0 %1851, %v1692
      %v1853 = vpop.permute.xlu0 %1852
      %1856 = vset.pattern.permute.xlu0 0
      %1857 = vperm.xlu0 %1856, %v1697
      %v1858 = vpop.permute.xlu0 %1857
      %1861 = vset.pattern.permute.xlu0 0
      %1862 = vperm.xlu0 %1861, %v1702
      %v1863 = vpop.permute.xlu0 %1862
      %1866 = vset.pattern.permute.xlu0 0
      %1867 = vperm.xlu0 %1866, %v1707
      %v1868 = vpop.permute.xlu0 %1867
      %1871 = vset.pattern.permute.xlu0 0
      %1872 = vperm.xlu0 %1871, %v1712
      %v1873 = vpop.permute.xlu0 %1872
      %1876 = vset.pattern.permute.xlu0 0
      %1877 = vperm.xlu0 %1876, %v1717
      %v1878 = vpop.permute.xlu0 %1877
      %1881 = vset.pattern.permute.xlu0 0
      %1882 = vperm.xlu0 %1881, %v1722
      %v1883 = vpop.permute.xlu0 %1882
      %1886 = vset.pattern.permute.xlu0 0
      %1887 = vperm.xlu0 %1886, %v1727
      %v1888 = vpop.permute.xlu0 %1887
      %1891 = vset.pattern.permute.xlu0 0
      %1892 = vperm.xlu0 %1891, %v1732
      %v1893 = vpop.permute.xlu0 %1892
      %1896 = vset.pattern.permute.xlu0 0
      %1897 = vperm.xlu0 %1896, %v1737
      %v1898 = vpop.permute.xlu0 %1897
      %1901 = vset.pattern.permute.xlu0 0
      %1902 = vperm.xlu0 %1901, %v1742
      %v1903 = vpop.permute.xlu0 %1902
      %1906 = vset.pattern.permute.xlu0 0
      %1907 = vperm.xlu0 %1906, %v1747
      %v1908 = vpop.permute.xlu0 %1907
      %1911 = vset.pattern.permute.xlu0 0
      %1912 = vperm.xlu0 %1911, %v1752
      %v1913 = vpop.permute.xlu0 %1912
      %1916 = vset.pattern.permute.xlu0 0
      %1917 = vperm.xlu0 %1916, %v1757
      %v1918 = vpop.permute.xlu0 %1917
      %1921 = vset.pattern.permute.xlu0 0
      %1922 = vperm.xlu0 %1921, %v1762
      %v1923 = vpop.permute.xlu0 %1922
      %1926 = vset.pattern.permute.xlu0 0
      %1927 = vperm.xlu0 %1926, %v1767
      %v1928 = vpop.permute.xlu0 %1927
      %1931 = vset.pattern.permute.xlu0 0
      %1932 = vperm.xlu0 %1931, %v1772
      %v1933 = vpop.permute.xlu0 %1932
      %1936 = vset.pattern.permute.xlu0 0
      %1937 = vperm.xlu0 %1936, %v1777
      %v1938 = vpop.permute.xlu0 %1937
      %1941 = vset.pattern.permute.xlu0 0
      %1942 = vperm.xlu0 %1941, %v1782
      %v1943 = vpop.permute.xlu0 %1942
      %1946 = vset.pattern.permute.xlu0 0
      %1947 = vperm.xlu0 %1946, %v1787
      %v1948 = vpop.permute.xlu0 %1947
      %1951 = vset.pattern.permute.xlu0 0
      %1952 = vperm.xlu0 %1951, %v1792
      %v1953 = vpop.permute.xlu0 %1952
      %1956 = vset.pattern.permute.xlu0 0
      %1957 = vperm.xlu0 %1956, %v1797
      %v1958 = vpop.permute.xlu0 %1957
      %1961 = vset.pattern.permute.xlu0 0
      %1962 = vperm.xlu0 %1961, %v1802
      %v1963 = vpop.permute.xlu0 %1962
      %1966 = vset.pattern.permute.xlu0 0
      %1967 = vperm.xlu0 %1966, %v1807
      %v1968 = vpop.permute.xlu0 %1967
      %1971 = vset.pattern.permute.xlu0 0
      %1972 = vperm.xlu0 %1971, %v1812
      %v1973 = vpop.permute.xlu0 %1972
      %1976 = vset.pattern.permute.xlu0 0
      %1977 = vperm.xlu0 %1976, %v1817
      %v1978 = vpop.permute.xlu0 %1977
      %1981 = vset.pattern.permute.xlu0 0
      %1982 = vperm.xlu0 %1981, %v1822
      %v1983 = vpop.permute.xlu0 %1982
      %1986 = vset.pattern.permute.xlu0 0
      %1987 = vperm.xlu0 %1986, %v1827
      %v1988 = vpop.permute.xlu0 %1987
      %v1990 = vmul.f32 %v1833, %v759
      %v1991 = vmul.f32 %v1838, %v760
      %v1992 = vmul.f32 %v1843, %v761
      %v1993 = vmul.f32 %v1848, %v762
      %v1994 = vmul.f32 %v1853, %v763
      %v1995 = vmul.f32 %v1858, %v764
      %v1996 = vmul.f32 %v1863, %v765
      %v1997 = vmul.f32 %v1868, %v766
      %v1998 = vmul.f32 %v1873, %v767
      %v1999 = vmul.f32 %v1878, %v768
      %v2000 = vmul.f32 %v1883, %v769
      %v2001 = vmul.f32 %v1888, %v770
      %v2002 = vmul.f32 %v1893, %v771
      %v2003 = vmul.f32 %v1898, %v772
      %v2004 = vmul.f32 %v1903, %v773
      %v2005 = vmul.f32 %v1908, %v774
      %v2006 = vmul.f32 %v1913, %v775
      %v2007 = vmul.f32 %v1918, %v776
      %v2008 = vmul.f32 %v1923, %v777
      %v2009 = vmul.f32 %v1928, %v778
      %v2010 = vmul.f32 %v1933, %v779
      %v2011 = vmul.f32 %v1938, %v780
      %v2012 = vmul.f32 %v1943, %v781
      %v2013 = vmul.f32 %v1948, %v782
      %v2014 = vmul.f32 %v1953, %v783
      %v2015 = vmul.f32 %v1958, %v784
      %v2016 = vmul.f32 %v1963, %v785
      %v2017 = vmul.f32 %v1968, %v786
      %v2018 = vmul.f32 %v1973, %v787
      %v2019 = vmul.f32 %v1978, %v788
      %v2020 = vmul.f32 %v1983, %v789
      %v2021 = vmul.f32 %v1988, %v790
      %2022 = vmatprep.subr.mxu0 0.0
      %2023 = vmatpush1.msra.mxu0 %v2005
      %2024 = vmatprep.subr.mxu0 0.0
      %2025 = vmatpush1.msra.mxu0 %v2004
      %2026 = vmatprep.subr.mxu0 0.0
      %2027 = vmatpush1.msra.mxu0 %v2003
      %2028 = vmatprep.subr.mxu0 0.0
      %2029 = vmatpush1.msra.mxu0 %v2002
      %2030 = vmatprep.subr.mxu0 0.0
      %2031 = vmatpush1.msra.mxu0 %v2001
      %2032 = vmatprep.subr.mxu0 0.0
      %2033 = vmatpush1.msra.mxu0 %v2000
      %2034 = vmatprep.subr.mxu0 0.0
      %2035 = vmatpush1.msra.mxu0 %v1999
      %2036 = vmatprep.subr.mxu0 0.0
      %2037 = vmatpush1.msra.mxu0 %v1998
      %2038 = vmatprep.subr.mxu0 0.0
      %2039 = vmatpush1.msra.mxu0 %v1997
      %2040 = vmatprep.subr.mxu0 0.0
      %2041 = vmatpush1.msra.mxu0 %v1996
      %2042 = vmatprep.subr.mxu0 0.0
      %2043 = vmatpush1.msra.mxu0 %v1995
      %2044 = vmatprep.subr.mxu0 0.0
      %2045 = vmatpush1.msra.mxu0 %v1994
      %2046 = vmatprep.subr.mxu0 0.0
      %2047 = vmatpush1.msra.mxu0 %v1993
      %2048 = vmatprep.subr.mxu0 0.0
      %2049 = vmatpush1.msra.mxu0 %v1992
      %2050 = vmatprep.subr.mxu0 0.0
      %2051 = vmatpush1.msra.mxu0 %v1991
      %2052 = vmatprep.subr.mxu0 0.0
      %2053 = vmatpush1.msra.mxu0 %v1990
      %2054 = vmatprep.subr.mxu0 0.0
      %2055 = vmatpush2.msra.mxu0 %v2021
      %2056 = vmatprep.subr.mxu0 0.0
      %2057 = vmatpush2.msra.mxu0 %v2020
      %2058 = vmatprep.subr.mxu0 0.0
      %2059 = vmatpush2.msra.mxu0 %v2019
      %2060 = vmatprep.subr.mxu0 0.0
      %2061 = vmatpush2.msra.mxu0 %v2018
      %2062 = vmatprep.subr.mxu0 0.0
      %2063 = vmatpush2.msra.mxu0 %v2017
      %2064 = vmatprep.subr.mxu0 0.0
      %2065 = vmatpush2.msra.mxu0 %v2016
      %2066 = vmatprep.subr.mxu0 0.0
      %2067 = vmatpush2.msra.mxu0 %v2015
      %2068 = vmatprep.subr.mxu0 0.0
      %2069 = vmatpush2.msra.mxu0 %v2014
      %2070 = vmatprep.subr.mxu0 0.0
      %2071 = vmatpush2.msra.mxu0 %v2013
      %2072 = vmatprep.subr.mxu0 0.0
      %2073 = vmatpush2.msra.mxu0 %v2012
      %2074 = vmatprep.subr.mxu0 0.0
      %2075 = vmatpush2.msra.mxu0 %v2011
      %2076 = vmatprep.subr.mxu0 0.0
      %2077 = vmatpush2.msra.mxu0 %v2010
      %2078 = vmatprep.subr.mxu0 0.0
      %2079 = vmatpush2.msra.mxu0 %v2009
      %2080 = vmatprep.subr.mxu0 0.0
      %2081 = vmatpush2.msra.mxu0 %v2008
      %2082 = vmatprep.subr.mxu0 0.0
      %2083 = vmatpush2.msra.mxu0 %v2007
      %2084 = vmatprep.subr.mxu0 0.0
      %2085 = vmatpush2.msra.mxu0 %v2006
      %2086 = vmatprep.mubr.f32.mxu0 %v462
      %2087 = vmatmul.mubr.f32.gmra.mxu0 %v461
      %v2088 = vpop.f32.mrf.mxu0
      %v2089 = vadd.f32 0.0, %v2088
      %v2090 = vpop.f32.mrf.mxu0
      %2091 = vmatprep.mubr.f32.mxu0 %v464
      %2092 = vmatmul.mubr.f32.gmra.mxu0 %v463
      %v2093 = vpop.f32.mrf.mxu0
      %v2094 = vadd.f32 0.0, %v2093
      %v2095 = vpop.f32.mrf.mxu0
      %2096 = vmatprep.mubr.f32.mxu0 %v466
      %2097 = vmatmul.mubr.f32.gmra.mxu0 %v465
      %v2098 = vpop.f32.mrf.mxu0
      %v2099 = vadd.f32 0.0, %v2098
      %v2100 = vpop.f32.mrf.mxu0
      %2101 = vmatprep.mubr.f32.mxu0 %v468
      %2102 = vmatmul.mubr.f32.gmra.mxu0 %v467
      %v2103 = vpop.f32.mrf.mxu0
      %v2104 = vadd.f32 0.0, %v2103
      %v2105 = vpop.f32.mrf.mxu0
      %2106 = vdwg.mxu0
      %vm2107 = vcmask 64512
      %v2108 = vsel %vm2107, %v2089, -inf
      %2109 = vmax.xlane.f32.xlu0 %v2108
      %v2110 = vpop.xlane.xlu0 %2109
      %v2111 = vsel %vm2107, %v2094, -inf
      %2112 = vmax.xlane.f32.xlu0 %v2111
      %v2113 = vpop.xlane.xlu0 %2112
      %v2114 = vsel %vm2107, %v2099, -inf
      %2115 = vmax.xlane.f32.xlu0 %v2114
      %v2116 = vpop.xlane.xlu0 %2115
      %v2117 = vsel %vm2107, %v2104, -inf
      %2118 = vmax.xlane.f32.xlu0 %v2117
      %v2119 = vpop.xlane.xlu0 %2118
      %v2120 = vsub.f32 %v2089, %v2110
      %v2121 = vsub.f32 %v2094, %v2113
      %v2122 = vsub.f32 %v2099, %v2116
      %v2123 = vsub.f32 %v2104, %v2119
      %v2124 = vmul.f32 %v2120, 1.442695
      %v2125 = vpow.pop %v2124
      %v2126 = vmul.f32 %v2121, 1.442695
      %v2127 = vpow.pop %v2126
      %v2128 = vmul.f32 %v2122, 1.442695
      %v2129 = vpow.pop %v2128
      %v2130 = vmul.f32 %v2123, 1.442695
      %v2131 = vpow.pop %v2130
      %v2132 = vsel %vm2107, %v2125, 0.0
      %2133 = vadd.xlane.f32.xlu0 %v2132
      %v2134 = vpop.xlane.xlu0 %2133
      %v2135 = vsel %vm2107, %v2127, 0.0
      %2136 = vadd.xlane.f32.xlu0 %v2135
      %v2137 = vpop.xlane.xlu0 %2136
      %v2138 = vsel %vm2107, %v2129, 0.0
      %2139 = vadd.xlane.f32.xlu0 %v2138
      %v2140 = vpop.xlane.xlu0 %2139
      %v2141 = vsel %vm2107, %v2131, 0.0
      %2142 = vadd.xlane.f32.xlu0 %v2141
      %v2143 = vpop.xlane.xlu0 %2142
      %v2144 = vrcp.pop %v2134
      %v2145 = vrcp.pop %v2137
      %v2146 = vrcp.pop %v2140
      %v2147 = vrcp.pop %v2143
      %v2148 = vmul.f32 %v2134, %v2144
      %v2149 = vmul.f32 %v2137, %v2145
      %v2150 = vmul.f32 %v2140, %v2146
      %v2151 = vmul.f32 %v2143, %v2147
      %v2152 = vsub.f32 2.0, %v2148
      %v2153 = vsub.f32 2.0, %v2149
      %v2154 = vsub.f32 2.0, %v2150
      %v2155 = vsub.f32 2.0, %v2151
      %v2156 = vmul.f32 %v2144, %v2152
      %v2157 = vmul.f32 %v2145, %v2153
      %v2158 = vmul.f32 %v2146, %v2154
      %v2159 = vmul.f32 %v2147, %v2155
      %v2160 = vmul.f32 %v2125, %v2156
      %v2161 = vmul.f32 %v2127, %v2157
      %v2162 = vmul.f32 %v2129, %v2158
      %v2163 = vmul.f32 %v2131, %v2159
      %2164 = vst.msk [vmem:[%s221] sm:$0xff] %vm2107, %v2160
      %2165 = vst.msk [vmem:[%s221 + $0x8] sm:$0xff] %vm2107, %v2161
      %2166 = vst.msk [vmem:[%s221 + $0x10] sm:$0xff] %vm2107, %v2162
      %2167 = vst.msk [vmem:[%s221 + $0x18] sm:$0xff] %vm2107, %v2163
      %s2168 = smul.u32 4, %s15
      %p2169 = scmp.lt.s32.totalorder %s2168, 7
      %s2170 = scalar_select %p2169, %s2168, 7
      %s2171 = smul.addr %s2170, 8
      %s2172 = scalar_lea.vmem %s4, %s2171
      // Predicated region
      $region37: #{tpu_custom_call.1} parent=35 // pred_check
        %p2173 = pneg %p127
      $region38: #{tpu_custom_call.1} parent=35 // pred_check_branch
        %2175 = sbr.rel (%p2173) target = $region40
      $region39: #{tpu_custom_call.1} parent=35 // pred_region
        %s2176 = smul.u32 4, %s15
      $region40: #{tpu_custom_call.1} parent=35 // pred_fallthru
        _
    $region36: #{tpu_custom_call.1} parent=5 // pred_fallthru
      _
    %p2177 = scmp.le.s32.totalorder 2, %s10
    // Predicated region
    $region41: #{tpu_custom_call.1} parent=5 // pred_check
      %p2178 = pneg %p2177
    $region42: #{tpu_custom_call.1} parent=5 // pred_check_branch
      %2180 = sbr.rel (%p2178) target = $region44
    $region43: #{tpu_custom_call.1} parent=5 // pred_region
      %s2181 = ssub.s32 %s10, 2
      // Predicated region
      $region45: #{tpu_custom_call.1} parent=43 // pred_check
        %p2182 = pneg %p133
      $region46: #{tpu_custom_call.1} parent=43 // pred_check_branch
        %2184 = sbr.rel (%p2182) target = $region48
      $region47: #{tpu_custom_call.1} parent=43 // pred_region
        %s2185 = smul.u32 4, %s16
        %p2186 = scmp.lt.s32.totalorder %s2185, 7
        %s2187 = scalar_select %p2186, %s2185, 7
        %s2188 = smul.addr %s2187, 8
        %s2189 = scalar_lea.vmem %s4, %s2188
      $region48: #{tpu_custom_call.1} parent=43 // pred_fallthru
        _
    $region44: #{tpu_custom_call.1} parent=5 // pred_fallthru
      _
  $region6: #{tpu_custom_call.1} parent=0 // loop_footer
    %s14 = sadd.s32 1, %s10
  $region7: #{tpu_custom_call.1} parent=0 // loop_footer_branch
    %9 = sbr.rel target = $region3
  $region8: #{tpu_custom_call.1} parent=0 // loop_exit
    _

</llo_original>
